<compile_context>
chip_gen: v7x
topology: tpu7x:2x2x1
jax: 0.10.0
libtpu: 0.0.40
codegen_flags: <defaults>
</compile_context>

<pallas_src>
import math

import jax
import jax.numpy as jnp
from jax.experimental import pallas as pl
from jax.experimental.pallas import tpu as pltpu

LANE = 128


def _round_up(n, m):
    return ((n + m - 1) // m) * m


def value_net_kernel(xt_ref, bpp_ref, w1t_ref, w2t_ref, aux_ref, out_ref):
    """One batch tile of the Fourier-feature value MLP (transposed layout).

    xt_ref  : (D, TB)      input coordinates, batch in lanes (D == 2)
    bpp_ref : (2F, D+1)    columns 0..D-1 = 2*pi*[B;B], column D = phase
                           (0 for the sin half, pi/2 for the cos half)
    w1t_ref : (H, 2F)      first Linear weight, bf16
    w2t_ref : (H, H)       second Linear weight, bf16
    aux_ref : (H, 4)       columns: b1 | b2 | w3 | b3 (b3 replicated)
    out_ref : (1, TB)      value per batch element, batch in lanes
    """
    xt = xt_ref[...]                      # (D, TB) f32
    bpp = bpp_ref[...]                    # (2F, D+1) f32
    aux = aux_ref[...]                    # (H, 4) f32

    d = xt.shape[0]

    # Fourier projection on the VPU: K == input_dim is tiny (2), a matmul
    # would push an almost-empty tile through the MXU for nothing.  Starting
    # from the phase column realizes cos via sin(x + pi/2) in the same pass.
    proj = bpp[:, d:d + 1]                          # (2F, 1) phase
    for k in range(d):                              # static, tiny loop
        proj = proj + bpp[:, k:k + 1] * xt[k:k + 1, :]
    phi = jnp.sin(proj)                             # (2F, TB), single EUP pass

    # Layer 1: (H, 2F) @ (2F, TB) on the MXU, bf16 operands, f32 accumulation.
    h1 = jnp.dot(w1t_ref[...], phi.astype(jnp.bfloat16),
                 preferred_element_type=jnp.float32) + aux[:, 0:1]
    h1 = jnp.maximum(h1, 0.0)

    # Layer 2: (H, H) @ (H, TB).
    h2 = jnp.dot(w2t_ref[...], h1.astype(jnp.bfloat16),
                 preferred_element_type=jnp.float32) + aux[:, 1:2]
    h2 = jnp.maximum(h2, 0.0)

    # Final Linear(H, 1): VPU multiply by the w3 column + sublane reduction.
    # The (1, TB) result is already batch-in-lanes -> full-width unmasked store.
    v = jnp.sum(h2 * aux[:, 2:3], axis=0, keepdims=True) + aux[0:1, 3:4]
    out_ref[...] = v


def value_network_forward(x, params, tile_b=2048):
    """x: (batch, input_dim) f32 -> (batch,) f32."""
    batch, input_dim = x.shape
    hidden_dim, fourier2 = params["w1t"].shape

    # Batch tile: as large as reasonable (grid-step overhead dominates small
    # tiles), multiple of 128 so the batch-in-lanes output stays lane-dense.
    padded_min = _round_up(batch, LANE)
    tile_b = max(LANE, min(_round_up(tile_b, LANE), padded_min))
    if padded_min >= 2 * LANE:
        # Keep >= 2 grid steps so "parallel" can shard across v7x's 2 TCs.
        tile_b = min(tile_b, _round_up(-(-padded_min // 2), LANE))
    padded = _round_up(batch, tile_b)

    # Transpose + zero-pad the batch into a (D, padded) batch-in-lanes slab.
    xt = jnp.zeros((input_dim, padded), jnp.float32).at[:, :batch].set(x.T)

    resident = lambda i: (0, 0)  # weights/biases stay resident in VMEM

    out = pl.pallas_call(
        value_net_kernel,
        out_shape=jax.ShapeDtypeStruct((1, padded), jnp.float32),
        grid=(padded // tile_b,),
        in_specs=[
            pl.BlockSpec((input_dim, tile_b), lambda i: (0, i)),
            pl.BlockSpec((fourier2, input_dim + 1), resident),
            pl.BlockSpec((hidden_dim, fourier2), resident),
            pl.BlockSpec((hidden_dim, hidden_dim), resident),
            pl.BlockSpec((hidden_dim, 4), resident),
        ],
        out_specs=pl.BlockSpec((1, tile_b), lambda i: (0, i)),
        compiler_params=pltpu.CompilerParams(
            dimension_semantics=("parallel",)),
    )(xt, params["bpp"], params["w1t"], params["w2t"], params["aux"])
    # Padded batch columns carry garbage (sin(phase) path) -- slice them off.
    return out[0, :batch]


def init_params(key, input_dim=2, fourier_dim=32, hidden_dim=128):
    """Deterministic synthetic parameters matching the PyTorch module shapes,
    repacked into the kernel-friendly layout."""
    ks = jax.random.split(key, 7)
    # Random Fourier projection buffer B: (fourier_dim, input_dim) * 10
    B = jax.random.normal(ks[0], (fourier_dim, input_dim), jnp.float32) * 10.0

    def linear(kw, kb, fan_in, fan_out):
        # PyTorch nn.Linear default init: U(-1/sqrt(fan_in), 1/sqrt(fan_in))
        bound = 1.0 / math.sqrt(fan_in)
        w = jax.random.uniform(kw, (fan_in, fan_out), jnp.float32, -bound, bound)
        b = jax.random.uniform(kb, (fan_out,), jnp.float32, -bound, bound)
        return w, b

    w1, b1 = linear(ks[1], ks[2], 2 * fourier_dim, hidden_dim)   # [sin; cos] rows
    w2, b2 = linear(ks[3], ks[4], hidden_dim, hidden_dim)
    w3, b3 = linear(ks[5], ks[6], hidden_dim, 1)

    # Fold 2*pi into B, duplicate for the sin/cos halves, append the phase
    # column (cos(x) = sin(x + pi/2)) -> single (2F, D+1) resident operand.
    two_pi_b = (2.0 * math.pi) * B                              # (F, D)
    phase = jnp.concatenate(
        [jnp.zeros((fourier_dim, 1), jnp.float32),
         jnp.full((fourier_dim, 1), 0.5 * math.pi, jnp.float32)], axis=0)
    bpp = jnp.concatenate(
        [jnp.concatenate([two_pi_b, two_pi_b], axis=0), phase], axis=1)

    # Small per-feature operands packed into one (H, 4) array: b1 | b2 | w3 | b3.
    aux = jnp.stack(
        [b1, b2, w3[:, 0], jnp.full((hidden_dim,), b3[0], jnp.float32)], axis=1)

    return {
        "bpp": bpp.astype(jnp.float32),             # (2F, D+1)
        "w1t": w1.T.astype(jnp.bfloat16),           # (H, 2F) bf16 MXU operand
        "w2t": w2.T.astype(jnp.bfloat16),           # (H, H)  bf16 MXU operand
        "aux": aux.astype(jnp.float32),             # (H, 4)  f32
    }


def value_network_ref(x, params):
    """Pure-JAX reference: same math and same bf16 quantization points as the
    kernel (so the comparison isolates the kernel wiring, not quantization)."""
    bpp = params["bpp"]
    d = x.shape[1]
    proj = x @ bpp[:, :d].T + bpp[:, d][None, :]        # (batch, 2F)
    phi = jnp.sin(proj)
    aux = params["aux"]
    h1 = jnp.maximum(
        jnp.dot(phi.astype(jnp.bfloat16), params["w1t"].T,
                preferred_element_type=jnp.float32) + aux[:, 0], 0.0)
    h2 = jnp.maximum(
        jnp.dot(h1.astype(jnp.bfloat16), params["w2t"].T,
                preferred_element_type=jnp.float32) + aux[:, 1], 0.0)
    return h2 @ aux[:, 2] + aux[0, 3]


if __name__ == "__main__":
    key = jax.random.PRNGKey(0)
    k_param, k_x, k_x2 = jax.random.split(key, 3)

    input_dim, fourier_dim, hidden_dim = 2, 32, 128
    params = init_params(k_param, input_dim, fourier_dim, hidden_dim)

    # CliffWalk states are (row, col) coordinates; small positive floats.
    batch = 8
    x = jax.random.uniform(k_x, (batch, input_dim), jnp.float32, 0.0, 4.0)
    out = value_network_forward(x, params)
    jax.block_until_ready(out)
    ref = value_network_ref(x, params)
    assert out.shape == (batch,)
    # Tolerance: sin/cos arguments reach O(1e3) (B*10 with 2*pi folded in), so
    # Mosaic-vs-XLA transcendental ULP differences can flip bf16 roundings of
    # phi; 2e-2 absorbs that while still catching any real wiring error.
    assert jnp.allclose(out, ref, atol=2e-2, rtol=2e-2), (out, ref)

    # Second check exercising the multi-step grid + batch padding path.
    batch2 = 300
    x2 = jax.random.uniform(k_x2, (batch2, input_dim), jnp.float32, 0.0, 4.0)
    out2 = value_network_forward(x2, params)
    jax.block_until_ready(out2)
    ref2 = value_network_ref(x2, params)
    assert out2.shape == (batch2,)
    assert jnp.allclose(out2, ref2, atol=2e-2, rtol=2e-2), (out2, ref2)

    print("KERNEL_OK")
</pallas_src>

<mosaic_0001>
module attributes {stable_mosaic.version = 11 : i64} {
  func.func @value_net_kernel(%arg0: i32, %arg1: memref<2x128xf32, #tpu.memory_space<vmem>>, %arg2: memref<64x3xf32, #tpu.memory_space<vmem>>, %arg3: memref<128x64xbf16, #tpu.memory_space<vmem>>, %arg4: memref<128x128xbf16, #tpu.memory_space<vmem>>, %arg5: memref<128x4xf32, #tpu.memory_space<vmem>>, %arg6: memref<1x128xf32, #tpu.memory_space<vmem>>) attributes {dimension_semantics = [#tpu.dimension_semantics<parallel>], iteration_bounds = array<i64: 1>, scalar_prefetch = 0 : i64, scratch_operands = 0 : i64, tpu.core_type = #tpu.core_type<tc>, window_params = [{transform_indices = @transform_0, window_bounds = array<i64: 2, 128>}, {pipeline_mode = #tpu.pipeline_mode<synchronous>, transform_indices = @transform_1, window_bounds = array<i64: 64, 3>}, {pipeline_mode = #tpu.pipeline_mode<synchronous>, transform_indices = @transform_2, window_bounds = array<i64: 128, 64>}, {pipeline_mode = #tpu.pipeline_mode<synchronous>, transform_indices = @transform_3, window_bounds = array<i64: 128, 128>}, {pipeline_mode = #tpu.pipeline_mode<synchronous>, transform_indices = @transform_4, window_bounds = array<i64: 128, 4>}, {transform_indices = @transform_5, window_bounds = array<i64: 1, 128>}]} {
    %c0 = arith.constant 0 : index
    %c0_0 = arith.constant 0 : index
    %0 = vector.load %arg1[%c0, %c0_0] : memref<2x128xf32, #tpu.memory_space<vmem>>, vector<2x128xf32>
    %c0_1 = arith.constant 0 : index
    %c0_2 = arith.constant 0 : index
    %1 = vector.load %arg2[%c0_1, %c0_2] : memref<64x3xf32, #tpu.memory_space<vmem>>, vector<64x3xf32>
    %c0_3 = arith.constant 0 : index
    %c0_4 = arith.constant 0 : index
    %2 = vector.load %arg5[%c0_3, %c0_4] : memref<128x4xf32, #tpu.memory_space<vmem>>, vector<128x4xf32>
    %3 = vector.extract_strided_slice %1 {offsets = [0, 2], sizes = [64, 1], strides = [1, 1]} : vector<64x3xf32> to vector<64x1xf32>
    %4 = vector.extract_strided_slice %1 {offsets = [0, 0], sizes = [64, 1], strides = [1, 1]} : vector<64x3xf32> to vector<64x1xf32>
    %5 = vector.extract_strided_slice %0 {offsets = [0, 0], sizes = [1, 128], strides = [1, 1]} : vector<2x128xf32> to vector<1x128xf32>
    %6 = vector.broadcast %4 : vector<64x1xf32> to vector<64x128xf32>
    %7 = vector.broadcast %5 : vector<1x128xf32> to vector<64x128xf32>
    %8 = arith.mulf %6, %7 : vector<64x128xf32>
    %9 = vector.broadcast %3 : vector<64x1xf32> to vector<64x128xf32>
    %10 = arith.addf %9, %8 : vector<64x128xf32>
    %11 = vector.extract_strided_slice %1 {offsets = [0, 1], sizes = [64, 1], strides = [1, 1]} : vector<64x3xf32> to vector<64x1xf32>
    %12 = vector.extract_strided_slice %0 {offsets = [1, 0], sizes = [1, 128], strides = [1, 1]} : vector<2x128xf32> to vector<1x128xf32>
    %13 = vector.broadcast %11 : vector<64x1xf32> to vector<64x128xf32>
    %14 = vector.broadcast %12 : vector<1x128xf32> to vector<64x128xf32>
    %15 = arith.mulf %13, %14 : vector<64x128xf32>
    %16 = arith.addf %10, %15 : vector<64x128xf32>
    %17 = math.sin %16 : vector<64x128xf32>
    %c0_5 = arith.constant 0 : index
    %c0_6 = arith.constant 0 : index
    %18 = vector.load %arg3[%c0_5, %c0_6] : memref<128x64xbf16, #tpu.memory_space<vmem>>, vector<128x64xbf16>
    %19 = arith.truncf %17 : vector<64x128xf32> to vector<64x128xbf16>
    %cst = arith.constant dense<0.000000e+00> : vector<128x128xf32>
    %20 = tpu.matmul %18, %19, %cst {dimension_numbers = #tpu.dot_dimension_numbers<[1], [0], [0], [1], [0, 0, 1, 1], [], []>} : vector<128x64xbf16>, vector<64x128xbf16>, vector<128x128xf32> -> vector<128x128xf32>
    %21 = vector.extract_strided_slice %2 {offsets = [0, 0], sizes = [128, 1], strides = [1, 1]} : vector<128x4xf32> to vector<128x1xf32>
    %22 = vector.broadcast %21 : vector<128x1xf32> to vector<128x128xf32>
    %23 = arith.addf %20, %22 : vector<128x128xf32>
    %cst_7 = arith.constant 0.000000e+00 : f32
    %24 = vector.broadcast %cst_7 : f32 to vector<128x128xf32>
    %25 = arith.maximumf %23, %24 : vector<128x128xf32>
    %c0_8 = arith.constant 0 : index
    %c0_9 = arith.constant 0 : index
    %26 = vector.load %arg4[%c0_8, %c0_9] : memref<128x128xbf16, #tpu.memory_space<vmem>>, vector<128x128xbf16>
    %27 = arith.truncf %25 : vector<128x128xf32> to vector<128x128xbf16>
    %cst_10 = arith.constant dense<0.000000e+00> : vector<128x128xf32>
    %28 = tpu.matmul %26, %27, %cst_10 {dimension_numbers = #tpu.dot_dimension_numbers<[1], [0], [0], [1], [0, 0, 1, 1], [], []>} : vector<128x128xbf16>, vector<128x128xbf16>, vector<128x128xf32> -> vector<128x128xf32>
    %29 = vector.extract_strided_slice %2 {offsets = [0, 1], sizes = [128, 1], strides = [1, 1]} : vector<128x4xf32> to vector<128x1xf32>
    %30 = vector.broadcast %29 : vector<128x1xf32> to vector<128x128xf32>
    %31 = arith.addf %28, %30 : vector<128x128xf32>
    %cst_11 = arith.constant 0.000000e+00 : f32
    %32 = vector.broadcast %cst_11 : f32 to vector<128x128xf32>
    %33 = arith.maximumf %31, %32 : vector<128x128xf32>
    %34 = vector.extract_strided_slice %2 {offsets = [0, 2], sizes = [128, 1], strides = [1, 1]} : vector<128x4xf32> to vector<128x1xf32>
    %35 = vector.broadcast %34 : vector<128x1xf32> to vector<128x128xf32>
    %36 = arith.mulf %33, %35 : vector<128x128xf32>
    %cst_12 = arith.constant dense<0.000000e+00> : vector<128xf32>
    %37 = vector.multi_reduction <add>, %36, %cst_12 [0] : vector<128x128xf32> to vector<128xf32>
    %38 = vector.shape_cast %37 : vector<128xf32> to vector<1x128xf32>
    %39 = vector.extract_strided_slice %2 {offsets = [0, 3], sizes = [1, 1], strides = [1, 1]} : vector<128x4xf32> to vector<1x1xf32>
    %40 = vector.broadcast %39 : vector<1x1xf32> to vector<1x128xf32>
    %41 = arith.addf %38, %40 : vector<1x128xf32>
    %c0_13 = arith.constant 0 : index
    %c0_14 = arith.constant 0 : index
    %42 = vector.load %arg6[%c0_13, %c0_14] : memref<1x128xf32, #tpu.memory_space<vmem>>, vector<1x128xf32>
    tpu.vector_store %arg6[%c0_13, %c0_14], %41 {strides = array<i32>} : memref<1x128xf32, #tpu.memory_space<vmem>>, vector<1x128xf32>,
    return
  }
  func.func @transform_0(%arg0: i32) -> (i32, i32) {
    %c0_i32 = arith.constant 0 : i32
    %c0_i32_0 = arith.constant 0 : i32
    return %c0_i32, %arg0 : i32, i32
  }
  func.func @transform_1(%arg0: i32) -> (i32, i32) {
    %c0_i32 = arith.constant 0 : i32
    %c0_i32_0 = arith.constant 0 : i32
    %c0_i32_1 = arith.constant 0 : i32
    return %c0_i32, %c0_i32_0 : i32, i32
  }
  func.func @transform_2(%arg0: i32) -> (i32, i32) {
    %c0_i32 = arith.constant 0 : i32
    %c0_i32_0 = arith.constant 0 : i32
    %c0_i32_1 = arith.constant 0 : i32
    return %c0_i32, %c0_i32_0 : i32, i32
  }
  func.func @transform_3(%arg0: i32) -> (i32, i32) {
    %c0_i32 = arith.constant 0 : i32
    %c0_i32_0 = arith.constant 0 : i32
    %c0_i32_1 = arith.constant 0 : i32
    return %c0_i32, %c0_i32_0 : i32, i32
  }
  func.func @transform_4(%arg0: i32) -> (i32, i32) {
    %c0_i32 = arith.constant 0 : i32
    %c0_i32_0 = arith.constant 0 : i32
    %c0_i32_1 = arith.constant 0 : i32
    return %c0_i32, %c0_i32_0 : i32, i32
  }
  func.func @transform_5(%arg0: i32) -> (i32, i32) {
    %c0_i32 = arith.constant 0 : i32
    %c0_i32_0 = arith.constant 0 : i32
    return %c0_i32, %arg0 : i32, i32
  }
}

</mosaic_0001>

<llo_original>
// kernel: tpu_custom_call.1
$region0: #{tpu_custom_call.1}
  #allocation0 [shape = 'u32[]', space=smem, size = 0x4, offset = 0x4, fixed_abs, tag = 'smem constant byte address 0x4 - core index']
  #allocation1 [shape = 'u32[144,128]{1,0:T(1,128)}', space=vmem, size = 0x12000, scoped, tag = 'internal scratch']
  %s0 = inlined_call_operand.vmem [shape: f32[2,128], index: 0, kind: input, shape index: {}]
  %s1 = inlined_call_operand.vmem [shape: f32[64,3], index: 1, kind: input, shape index: {}]
  %s2 = inlined_call_operand.vmem [shape: bf16[128,64], index: 2, kind: input, shape index: {}]
  %s3 = inlined_call_operand.vmem [shape: bf16[128,128], index: 3, kind: input, shape index: {}]
  %s4 = inlined_call_operand.vmem [shape: f32[128,4], index: 4, kind: input, shape index: {}]
  %s5 = inlined_call_operand.hbm [shape: f32[1,128], index: 5, kind: output, shape index: {}]
  %s6 = sld [smem:[#allocation0]]
  $region30: #{tpu_custom_call.1} parent=0
    _
  %s8 = ssub.s32 1, %s6
  %s9 = scalar_select 0, %s8, %s6
  $region1: #{tpu_custom_call.1} parent=0
    #allocation2 [shape = 'u8[512]{0}', space=vmem, size = 0x400, scoped, tag = 'output window, operand 0, single buffered']
    #allocation3 [shape = 's32[1]{0}', space=sflag, size = 0x4, scoped, tag = 'scoped memory for tpu_custom_call.1']
    %10 = vsyncpa [#allocation3], 0
    // Predicated region
    $region2: #{tpu_custom_call.1} parent=1 // pred_check
      _
    $region3: #{tpu_custom_call.1} parent=1 // pred_check_branch
      %12 = sbr.rel (0) target = $region5
    $region4: #{tpu_custom_call.1} parent=1 // pred_region
      _
    $region5: #{tpu_custom_call.1} parent=1 // pred_fallthru
      _
    // Predicated region
    $region6: #{tpu_custom_call.1} parent=1 // pred_check
      _
    $region7: #{tpu_custom_call.1} parent=1 // pred_check_branch
      %14 = sbr.rel (0) target = $region9
    $region8: #{tpu_custom_call.1} parent=1 // pred_region
      _
    $region9: #{tpu_custom_call.1} parent=1 // pred_fallthru
      _
    // Predicated region
    $region10: #{tpu_custom_call.1} parent=1 // pred_check
      _
    $region11: #{tpu_custom_call.1} parent=1 // pred_check_branch
      %16 = sbr.rel (0) target = $region13
    $region12: #{tpu_custom_call.1} parent=1 // pred_region
      _
    $region13: #{tpu_custom_call.1} parent=1 // pred_fallthru
      _
    // Predicated region
    $region14: #{tpu_custom_call.1} parent=1 // pred_check
      _
    $region15: #{tpu_custom_call.1} parent=1 // pred_check_branch
      %18 = sbr.rel (0) target = $region17
    $region16: #{tpu_custom_call.1} parent=1 // pred_region
      _
    $region17: #{tpu_custom_call.1} parent=1 // pred_fallthru
      _
    // Predicated region
    $region18: #{tpu_custom_call.1} parent=1 // pred_check
      _
    $region19: #{tpu_custom_call.1} parent=1 // pred_check_branch
      %20 = sbr.rel (0) target = $region21
    $region20: #{tpu_custom_call.1} parent=1 // pred_region
      _
    $region21: #{tpu_custom_call.1} parent=1 // pred_fallthru
      _
    %v22 = vld [vmem:[%s0] sm:$0x3]
    %v23 = vld [vmem:[%s1] sm:$0xff]
    %v24 = vld [vmem:[%s1 + $0x8] sm:$0xff]
    %v25 = vld [vmem:[%s1 + $0x10] sm:$0xff]
    %v26 = vld [vmem:[%s1 + $0x18] sm:$0xff]
    %v27 = vld [vmem:[%s1 + $0x20] sm:$0xff]
    %v28 = vld [vmem:[%s1 + $0x28] sm:$0xff]
    %v29 = vld [vmem:[%s1 + $0x30] sm:$0xff]
    %v30 = vld [vmem:[%s1 + $0x38] sm:$0xff]
    %v31 = vld [vmem:[%s4] sm:$0xff]
    %v32 = vld [vmem:[%s4 + $0x8] sm:$0xff]
    %v33 = vld [vmem:[%s4 + $0x10] sm:$0xff]
    %v34 = vld [vmem:[%s4 + $0x18] sm:$0xff]
    %v35 = vld [vmem:[%s4 + $0x20] sm:$0xff]
    %v36 = vld [vmem:[%s4 + $0x28] sm:$0xff]
    %v37 = vld [vmem:[%s4 + $0x30] sm:$0xff]
    %v38 = vld [vmem:[%s4 + $0x38] sm:$0xff]
    %v39 = vld [vmem:[%s4 + $0x40] sm:$0xff]
    %v40 = vld [vmem:[%s4 + $0x48] sm:$0xff]
    %v41 = vld [vmem:[%s4 + $0x50] sm:$0xff]
    %v42 = vld [vmem:[%s4 + $0x58] sm:$0xff]
    %v43 = vld [vmem:[%s4 + $0x60] sm:$0xff]
    %v44 = vld [vmem:[%s4 + $0x68] sm:$0xff]
    %v45 = vld [vmem:[%s4 + $0x70] sm:$0xff]
    %v46 = vld [vmem:[%s4 + $0x78] sm:$0xff]
    %48 = vset.pattern.permute.xlu0 0
    %49 = vperm.xlu0 %48, %v23
    %v50 = vpop.permute.xlu0 %49
    %53 = vset.pattern.permute.xlu0 0
    %54 = vperm.xlu0 %53, %v24
    %v55 = vpop.permute.xlu0 %54
    %58 = vset.pattern.permute.xlu0 0
    %59 = vperm.xlu0 %58, %v25
    %v60 = vpop.permute.xlu0 %59
    %63 = vset.pattern.permute.xlu0 0
    %64 = vperm.xlu0 %63, %v26
    %v65 = vpop.permute.xlu0 %64
    %68 = vset.pattern.permute.xlu0 0
    %69 = vperm.xlu0 %68, %v27
    %v70 = vpop.permute.xlu0 %69
    %73 = vset.pattern.permute.xlu0 0
    %74 = vperm.xlu0 %73, %v28
    %v75 = vpop.permute.xlu0 %74
    %78 = vset.pattern.permute.xlu0 0
    %79 = vperm.xlu0 %78, %v29
    %v80 = vpop.permute.xlu0 %79
    %83 = vset.pattern.permute.xlu0 0
    %84 = vperm.xlu0 %83, %v30
    %v85 = vpop.permute.xlu0 %84
    %v87 = vlaneseq
    %v88 = vshrl.u32 %v87, 7
    %v89 = vsub.s32 0, %v88
    %v90 = vrot.slane %v22, %v89
    %v91 = vmul.f32 %v50, %v90
    %v92 = vmul.f32 %v55, %v90
    %v93 = vmul.f32 %v60, %v90
    %v94 = vmul.f32 %v65, %v90
    %v95 = vmul.f32 %v70, %v90
    %v96 = vmul.f32 %v75, %v90
    %v97 = vmul.f32 %v80, %v90
    %v98 = vmul.f32 %v85, %v90
    %99 = vset.pattern.permute.xlu0 2
    %100 = vperm.xlu0 %99, %v23
    %v101 = vpop.permute.xlu0 %100
    %103 = vset.pattern.permute.xlu0 2
    %104 = vperm.xlu0 %103, %v24
    %v105 = vpop.permute.xlu0 %104
    %107 = vset.pattern.permute.xlu0 2
    %108 = vperm.xlu0 %107, %v25
    %v109 = vpop.permute.xlu0 %108
    %111 = vset.pattern.permute.xlu0 2
    %112 = vperm.xlu0 %111, %v26
    %v113 = vpop.permute.xlu0 %112
    %115 = vset.pattern.permute.xlu0 2
    %116 = vperm.xlu0 %115, %v27
    %v117 = vpop.permute.xlu0 %116
    %119 = vset.pattern.permute.xlu0 2
    %120 = vperm.xlu0 %119, %v28
    %v121 = vpop.permute.xlu0 %120
    %123 = vset.pattern.permute.xlu0 2
    %124 = vperm.xlu0 %123, %v29
    %v125 = vpop.permute.xlu0 %124
    %127 = vset.pattern.permute.xlu0 2
    %128 = vperm.xlu0 %127, %v30
    %v129 = vpop.permute.xlu0 %128
    %v131 = vadd.f32 %v101, %v91
    %v132 = vadd.f32 %v105, %v92
    %v133 = vadd.f32 %v109, %v93
    %v134 = vadd.f32 %v113, %v94
    %v135 = vadd.f32 %v117, %v95
    %v136 = vadd.f32 %v121, %v96
    %v137 = vadd.f32 %v125, %v97
    %v138 = vadd.f32 %v129, %v98
    %139 = vset.pattern.permute.xlu0 1
    %140 = vperm.xlu0 %139, %v23
    %v141 = vpop.permute.xlu0 %140
    %143 = vset.pattern.permute.xlu0 1
    %144 = vperm.xlu0 %143, %v24
    %v145 = vpop.permute.xlu0 %144
    %147 = vset.pattern.permute.xlu0 1
    %148 = vperm.xlu0 %147, %v25
    %v149 = vpop.permute.xlu0 %148
    %151 = vset.pattern.permute.xlu0 1
    %152 = vperm.xlu0 %151, %v26
    %v153 = vpop.permute.xlu0 %152
    %155 = vset.pattern.permute.xlu0 1
    %156 = vperm.xlu0 %155, %v27
    %v157 = vpop.permute.xlu0 %156
    %159 = vset.pattern.permute.xlu0 1
    %160 = vperm.xlu0 %159, %v28
    %v161 = vpop.permute.xlu0 %160
    %163 = vset.pattern.permute.xlu0 1
    %164 = vperm.xlu0 %163, %v29
    %v165 = vpop.permute.xlu0 %164
    %167 = vset.pattern.permute.xlu0 1
    %168 = vperm.xlu0 %167, %v30
    %v169 = vpop.permute.xlu0 %168
    %v171 = vlaneseq
    %v172 = vshrl.u32 %v171, 7
    %v173 = vsub.s32 1, %v172
    %v174 = vrot.slane %v22, %v173
    %v175 = vmul.f32 %v141, %v174
    %v176 = vmul.f32 %v145, %v174
    %v177 = vmul.f32 %v149, %v174
    %v178 = vmul.f32 %v153, %v174
    %v179 = vmul.f32 %v157, %v174
    %v180 = vmul.f32 %v161, %v174
    %v181 = vmul.f32 %v165, %v174
    %v182 = vmul.f32 %v169, %v174
    %v183 = vadd.f32 %v131, %v175
    %v184 = vadd.f32 %v132, %v176
    %v185 = vadd.f32 %v133, %v177
    %v186 = vadd.f32 %v134, %v178
    %v187 = vadd.f32 %v135, %v179
    %v188 = vadd.f32 %v136, %v180
    %v189 = vadd.f32 %v137, %v181
    %v190 = vadd.f32 %v138, %v182
    %v191 = vand.u32 2147483647, %v183
    %vm192 = vcmp.le.f32.partialorder %v191, 0.7853982
    %vm193 = vcmp.lt.s32.totalorder %v183, 0
    %v194 = vand.u32 %v183, 2139095040
    %v195 = vshrl.u32 %v194, 23
    %v196 = vsub.s32 %v195, 127
    %v197 = vand.u32 2147483647, %v183
    %v198 = vand.u32 %v197, 8388607
    %v199 = vor.u32 %v198, 8388608
    %v200 = vsub.s32 0, %v199
    %v201 = vadd.s32 %v196, 1
    %vm202 = vcmp.gt.s32.totalorder %v201, 0
    %v203 = vsel %vm202, %v201, 0
    %v204 = vshrl.u32 %v203, 5
    %v205 = vand.u32 %v203, 31
    %v206 = vsub.s32 32, %v205
    %v207 = vshrl.u32 683565275, %v206
    %v208 = vshll.u32 683565275, %v205
    %v209 = vshrl.u32 2475754826, %v206
    %v210 = vor.u32 %v208, %v209
    %v211 = vshll.u32 2475754826, %v205
    %v212 = vshrl.u32 2131351028, %v206
    %v213 = vor.u32 %v211, %v212
    %v214 = vshll.u32 2131351028, %v205
    %v215 = vshrl.u32 2102212464, %v206
    %v216 = vor.u32 %v214, %v215
    %v217 = vshll.u32 2102212464, %v205
    %v218 = vshrl.u32 920167782, %v206
    %v219 = vor.u32 %v217, %v218
    %v220 = vshll.u32 920167782, %v205
    %v221 = vshrl.u32 1326507024, %v206
    %v222 = vor.u32 %v220, %v221
    %vm223 = vcmp.lt.s32.totalorder %v204, 1
    %vm224 = vcmp.lt.s32.totalorder %v204, 2
    %vm225 = vcmp.lt.s32.totalorder %v204, 3
    %vm226 = vcmp.lt.s32.totalorder %v204, 4
    %v227 = vsel %vm223, %v207, %v210
    %v228 = vsel %vm226, %v216, 2102212464
    %v229 = vsel %vm225, %v213, %v228
    %v230 = vsel %vm224, %v227, %v229
    %v231 = vsel %vm223, %v210, %v213
    %v232 = vsel %vm226, %v219, 920167782
    %v233 = vsel %vm225, %v216, %v232
    %v234 = vsel %vm224, %v231, %v233
    %v235 = vsel %vm223, %v213, %v216
    %v236 = vsel %vm226, %v222, 1326507024
    %v237 = vsel %vm225, %v219, %v236
    %v238 = vsel %vm224, %v235, %v237
    %v239 = vshll.u32 %v199, 8
    %v240 = vmul.u32.u64.compose %v239, %v238
    %v241 = vextract.low.u32 %v240
    %v242 = vextract.high.u32 %v240
    %v243 = vmul.u32.u64.compose %v239, %v234
    %v244 = vextract.low.u32 %v243
    %v245 = vextract.high.u32 %v243
    %v246 = vmul.u32 %v239, %v230
    %v247 = vadd.s32 %v242, %v244
    %vm248 = vc.u32 %v242, %v244
    %v249 = vadd.s32 %v245, 1
    %v250 = vsel %vm248, %v249, %v245
    %v251 = vadd.s32 %v246, %v250
    %v252 = vadd.s32 %v251, 536870912
    %v253 = vshrl.u32 %v252, 30
    %v254 = vshll.u32 %v253, 30
    %v255 = vsub.s32 %v251, %v254
    %vm256 = vcmp.lt.s32.totalorder %v255, 0
    %v257 = vsub.s32 0, %v255
    %v258 = vsel %vm256, %v257, %v255
    %v259 = vclz %v258
    %v260 = vsub.s32 %v259, 2
    %vm261 = vcmp.gt.s32.totalorder 0, %v260
    %v262 = vsel %vm261, 0, %v260
    %v263 = vsub.s32 32, %v262
    %v264 = vshll.u32 %v255, %v262
    %v265 = vshrl.u32 %v247, %v263
    %v266 = vor.u32 %v264, %v265
    %v267 = vsub.s32 4294967266, %v262
    %v268 = vadd.s32 %v267, 127
    %v269 = vshll.u32 %v268, 23
    %v270 = vor.u32 4788187, %v269
    %v271 = vand.u32 2147483647, %v270
    %v273 = vcvt.s32.f32 %v266
    %v274 = vmul.f32 %v273, %v271
    %v275 = vxor.u32 %v274, 2147483648
    %v276 = vsel %vm193, %v275, %v274
    %v277 = vsub.s32 4, %v253
    %v278 = vsel %vm193, %v277, %v253
    %v279 = vsel %vm192, %v183, %v276
    %v280 = vsel %vm192, 0, %v278
    %v281 = vcosq.f32.pop %v279
    %v282 = vsinq.f32.pop %v279
    %vm283 = vweird.f32 %v183
    %v284 = vadd.s32 %v280, 3
    %v285 = vand.u32 %v284, 3
    %vm286 = vcmp.lt.s32.totalorder %v285, 2
    %vm287 = vcmp.eq.s32.totalorder %v285, 0
    %v288 = vxor.u32 %v282, 2147483648
    %v289 = vsel %vm287, %v281, %v288
    %vm290 = vcmp.eq.s32.totalorder %v285, 2
    %v291 = vxor.u32 %v281, 2147483648
    %v292 = vsel %vm290, %v291, %v282
    %v293 = vsel %vm286, %v289, %v292
    %v294 = vsel %vm283, nan, %v293
    %v295 = vand.u32 2147483647, %v184
    %vm296 = vcmp.le.f32.partialorder %v295, 0.7853982
    %vm297 = vcmp.lt.s32.totalorder %v184, 0
    %v298 = vand.u32 %v184, 2139095040
    %v299 = vshrl.u32 %v298, 23
    %v300 = vsub.s32 %v299, 127
    %v301 = vand.u32 2147483647, %v184
    %v302 = vand.u32 %v301, 8388607
    %v303 = vor.u32 %v302, 8388608
    %v304 = vsub.s32 0, %v303
    %v305 = vadd.s32 %v300, 1
    %vm306 = vcmp.gt.s32.totalorder %v305, 0
    %v307 = vsel %vm306, %v305, 0
    %v308 = vshrl.u32 %v307, 5
    %v309 = vand.u32 %v307, 31
    %v310 = vsub.s32 32, %v309
    %v311 = vshrl.u32 683565275, %v310
    %v312 = vshll.u32 683565275, %v309
    %v313 = vshrl.u32 2475754826, %v310
    %v314 = vor.u32 %v312, %v313
    %v315 = vshll.u32 2475754826, %v309
    %v316 = vshrl.u32 2131351028, %v310
    %v317 = vor.u32 %v315, %v316
    %v318 = vshll.u32 2131351028, %v309
    %v319 = vshrl.u32 2102212464, %v310
    %v320 = vor.u32 %v318, %v319
    %v321 = vshll.u32 2102212464, %v309
    %v322 = vshrl.u32 920167782, %v310
    %v323 = vor.u32 %v321, %v322
    %v324 = vshll.u32 920167782, %v309
    %v325 = vshrl.u32 1326507024, %v310
    %v326 = vor.u32 %v324, %v325
    %vm327 = vcmp.lt.s32.totalorder %v308, 1
    %vm328 = vcmp.lt.s32.totalorder %v308, 2
    %vm329 = vcmp.lt.s32.totalorder %v308, 3
    %vm330 = vcmp.lt.s32.totalorder %v308, 4
    %v331 = vsel %vm327, %v311, %v314
    %v332 = vsel %vm330, %v320, 2102212464
    %v333 = vsel %vm329, %v317, %v332
    %v334 = vsel %vm328, %v331, %v333
    %v335 = vsel %vm327, %v314, %v317
    %v336 = vsel %vm330, %v323, 920167782
    %v337 = vsel %vm329, %v320, %v336
    %v338 = vsel %vm328, %v335, %v337
    %v339 = vsel %vm327, %v317, %v320
    %v340 = vsel %vm330, %v326, 1326507024
    %v341 = vsel %vm329, %v323, %v340
    %v342 = vsel %vm328, %v339, %v341
    %v343 = vshll.u32 %v303, 8
    %v344 = vmul.u32.u64.compose %v343, %v342
    %v345 = vextract.low.u32 %v344
    %v346 = vextract.high.u32 %v344
    %v347 = vmul.u32.u64.compose %v343, %v338
    %v348 = vextract.low.u32 %v347
    %v349 = vextract.high.u32 %v347
    %v350 = vmul.u32 %v343, %v334
    %v351 = vadd.s32 %v346, %v348
    %vm352 = vc.u32 %v346, %v348
    %v353 = vadd.s32 %v349, 1
    %v354 = vsel %vm352, %v353, %v349
    %v355 = vadd.s32 %v350, %v354
    %v356 = vadd.s32 %v355, 536870912
    %v357 = vshrl.u32 %v356, 30
    %v358 = vshll.u32 %v357, 30
    %v359 = vsub.s32 %v355, %v358
    %vm360 = vcmp.lt.s32.totalorder %v359, 0
    %v361 = vsub.s32 0, %v359
    %v362 = vsel %vm360, %v361, %v359
    %v363 = vclz %v362
    %v364 = vsub.s32 %v363, 2
    %vm365 = vcmp.gt.s32.totalorder 0, %v364
    %v366 = vsel %vm365, 0, %v364
    %v367 = vsub.s32 32, %v366
    %v368 = vshll.u32 %v359, %v366
    %v369 = vshrl.u32 %v351, %v367
    %v370 = vor.u32 %v368, %v369
    %v371 = vsub.s32 4294967266, %v366
    %v372 = vadd.s32 %v371, 127
    %v373 = vshll.u32 %v372, 23
    %v374 = vor.u32 4788187, %v373
    %v375 = vand.u32 2147483647, %v374
    %v377 = vcvt.s32.f32 %v370
    %v378 = vmul.f32 %v377, %v375
    %v379 = vxor.u32 %v378, 2147483648
    %v380 = vsel %vm297, %v379, %v378
    %v381 = vsub.s32 4, %v357
    %v382 = vsel %vm297, %v381, %v357
    %v383 = vsel %vm296, %v184, %v380
    %v384 = vsel %vm296, 0, %v382
    %v385 = vcosq.f32.pop %v383
    %v386 = vsinq.f32.pop %v383
    %vm387 = vweird.f32 %v184
    %v388 = vadd.s32 %v384, 3
    %v389 = vand.u32 %v388, 3
    %vm390 = vcmp.lt.s32.totalorder %v389, 2
    %vm391 = vcmp.eq.s32.totalorder %v389, 0
    %v392 = vxor.u32 %v386, 2147483648
    %v393 = vsel %vm391, %v385, %v392
    %vm394 = vcmp.eq.s32.totalorder %v389, 2
    %v395 = vxor.u32 %v385, 2147483648
    %v396 = vsel %vm394, %v395, %v386
    %v397 = vsel %vm390, %v393, %v396
    %v398 = vsel %vm387, nan, %v397
    %v399 = vand.u32 2147483647, %v185
    %vm400 = vcmp.le.f32.partialorder %v399, 0.7853982
    %vm401 = vcmp.lt.s32.totalorder %v185, 0
    %v402 = vand.u32 %v185, 2139095040
    %v403 = vshrl.u32 %v402, 23
    %v404 = vsub.s32 %v403, 127
    %v405 = vand.u32 2147483647, %v185
    %v406 = vand.u32 %v405, 8388607
    %v407 = vor.u32 %v406, 8388608
    %v408 = vsub.s32 0, %v407
    %v409 = vadd.s32 %v404, 1
    %vm410 = vcmp.gt.s32.totalorder %v409, 0
    %v411 = vsel %vm410, %v409, 0
    %v412 = vshrl.u32 %v411, 5
    %v413 = vand.u32 %v411, 31
    %v414 = vsub.s32 32, %v413
    %v415 = vshrl.u32 683565275, %v414
    %v416 = vshll.u32 683565275, %v413
    %v417 = vshrl.u32 2475754826, %v414
    %v418 = vor.u32 %v416, %v417
    %v419 = vshll.u32 2475754826, %v413
    %v420 = vshrl.u32 2131351028, %v414
    %v421 = vor.u32 %v419, %v420
    %v422 = vshll.u32 2131351028, %v413
    %v423 = vshrl.u32 2102212464, %v414
    %v424 = vor.u32 %v422, %v423
    %v425 = vshll.u32 2102212464, %v413
    %v426 = vshrl.u32 920167782, %v414
    %v427 = vor.u32 %v425, %v426
    %v428 = vshll.u32 920167782, %v413
    %v429 = vshrl.u32 1326507024, %v414
    %v430 = vor.u32 %v428, %v429
    %vm431 = vcmp.lt.s32.totalorder %v412, 1
    %vm432 = vcmp.lt.s32.totalorder %v412, 2
    %vm433 = vcmp.lt.s32.totalorder %v412, 3
    %vm434 = vcmp.lt.s32.totalorder %v412, 4
    %v435 = vsel %vm431, %v415, %v418
    %v436 = vsel %vm434, %v424, 2102212464
    %v437 = vsel %vm433, %v421, %v436
    %v438 = vsel %vm432, %v435, %v437
    %v439 = vsel %vm431, %v418, %v421
    %v440 = vsel %vm434, %v427, 920167782
    %v441 = vsel %vm433, %v424, %v440
    %v442 = vsel %vm432, %v439, %v441
    %v443 = vsel %vm431, %v421, %v424
    %v444 = vsel %vm434, %v430, 1326507024
    %v445 = vsel %vm433, %v427, %v444
    %v446 = vsel %vm432, %v443, %v445
    %v447 = vshll.u32 %v407, 8
    %v448 = vmul.u32.u64.compose %v447, %v446
    %v449 = vextract.low.u32 %v448
    %v450 = vextract.high.u32 %v448
    %v451 = vmul.u32.u64.compose %v447, %v442
    %v452 = vextract.low.u32 %v451
    %v453 = vextract.high.u32 %v451
    %v454 = vmul.u32 %v447, %v438
    %v455 = vadd.s32 %v450, %v452
    %vm456 = vc.u32 %v450, %v452
    %v457 = vadd.s32 %v453, 1
    %v458 = vsel %vm456, %v457, %v453
    %v459 = vadd.s32 %v454, %v458
    %v460 = vadd.s32 %v459, 536870912
    %v461 = vshrl.u32 %v460, 30
    %v462 = vshll.u32 %v461, 30
    %v463 = vsub.s32 %v459, %v462
    %vm464 = vcmp.lt.s32.totalorder %v463, 0
    %v465 = vsub.s32 0, %v463
    %v466 = vsel %vm464, %v465, %v463
    %v467 = vclz %v466
    %v468 = vsub.s32 %v467, 2
    %vm469 = vcmp.gt.s32.totalorder 0, %v468
    %v470 = vsel %vm469, 0, %v468
    %v471 = vsub.s32 32, %v470
    %v472 = vshll.u32 %v463, %v470
    %v473 = vshrl.u32 %v455, %v471
    %v474 = vor.u32 %v472, %v473
    %v475 = vsub.s32 4294967266, %v470
    %v476 = vadd.s32 %v475, 127
    %v477 = vshll.u32 %v476, 23
    %v478 = vor.u32 4788187, %v477
    %v479 = vand.u32 2147483647, %v478
    %v481 = vcvt.s32.f32 %v474
    %v482 = vmul.f32 %v481, %v479
    %v483 = vxor.u32 %v482, 2147483648
    %v484 = vsel %vm401, %v483, %v482
    %v485 = vsub.s32 4, %v461
    %v486 = vsel %vm401, %v485, %v461
    %v487 = vsel %vm400, %v185, %v484
    %v488 = vsel %vm400, 0, %v486
    %v489 = vcosq.f32.pop %v487
    %v490 = vsinq.f32.pop %v487
    %vm491 = vweird.f32 %v185
    %v492 = vadd.s32 %v488, 3
    %v493 = vand.u32 %v492, 3
    %vm494 = vcmp.lt.s32.totalorder %v493, 2
    %vm495 = vcmp.eq.s32.totalorder %v493, 0
    %v496 = vxor.u32 %v490, 2147483648
    %v497 = vsel %vm495, %v489, %v496
    %vm498 = vcmp.eq.s32.totalorder %v493, 2
    %v499 = vxor.u32 %v489, 2147483648
    %v500 = vsel %vm498, %v499, %v490
    %v501 = vsel %vm494, %v497, %v500
    %v502 = vsel %vm491, nan, %v501
    %v503 = vand.u32 2147483647, %v186
    %vm504 = vcmp.le.f32.partialorder %v503, 0.7853982
    %vm505 = vcmp.lt.s32.totalorder %v186, 0
    %v506 = vand.u32 %v186, 2139095040
    %v507 = vshrl.u32 %v506, 23
    %v508 = vsub.s32 %v507, 127
    %v509 = vand.u32 2147483647, %v186
    %v510 = vand.u32 %v509, 8388607
    %v511 = vor.u32 %v510, 8388608
    %v512 = vsub.s32 0, %v511
    %v513 = vadd.s32 %v508, 1
    %vm514 = vcmp.gt.s32.totalorder %v513, 0
    %v515 = vsel %vm514, %v513, 0
    %v516 = vshrl.u32 %v515, 5
    %v517 = vand.u32 %v515, 31
    %v518 = vsub.s32 32, %v517
    %v519 = vshrl.u32 683565275, %v518
    %v520 = vshll.u32 683565275, %v517
    %v521 = vshrl.u32 2475754826, %v518
    %v522 = vor.u32 %v520, %v521
    %v523 = vshll.u32 2475754826, %v517
    %v524 = vshrl.u32 2131351028, %v518
    %v525 = vor.u32 %v523, %v524
    %v526 = vshll.u32 2131351028, %v517
    %v527 = vshrl.u32 2102212464, %v518
    %v528 = vor.u32 %v526, %v527
    %v529 = vshll.u32 2102212464, %v517
    %v530 = vshrl.u32 920167782, %v518
    %v531 = vor.u32 %v529, %v530
    %v532 = vshll.u32 920167782, %v517
    %v533 = vshrl.u32 1326507024, %v518
    %v534 = vor.u32 %v532, %v533
    %vm535 = vcmp.lt.s32.totalorder %v516, 1
    %vm536 = vcmp.lt.s32.totalorder %v516, 2
    %vm537 = vcmp.lt.s32.totalorder %v516, 3
    %vm538 = vcmp.lt.s32.totalorder %v516, 4
    %v539 = vsel %vm535, %v519, %v522
    %v540 = vsel %vm538, %v528, 2102212464
    %v541 = vsel %vm537, %v525, %v540
    %v542 = vsel %vm536, %v539, %v541
    %v543 = vsel %vm535, %v522, %v525
    %v544 = vsel %vm538, %v531, 920167782
    %v545 = vsel %vm537, %v528, %v544
    %v546 = vsel %vm536, %v543, %v545
    %v547 = vsel %vm535, %v525, %v528
    %v548 = vsel %vm538, %v534, 1326507024
    %v549 = vsel %vm537, %v531, %v548
    %v550 = vsel %vm536, %v547, %v549
    %v551 = vshll.u32 %v511, 8
    %v552 = vmul.u32.u64.compose %v551, %v550
    %v553 = vextract.low.u32 %v552
    %v554 = vextract.high.u32 %v552
    %v555 = vmul.u32.u64.compose %v551, %v546
    %v556 = vextract.low.u32 %v555
    %v557 = vextract.high.u32 %v555
    %v558 = vmul.u32 %v551, %v542
    %v559 = vadd.s32 %v554, %v556
    %vm560 = vc.u32 %v554, %v556
    %v561 = vadd.s32 %v557, 1
    %v562 = vsel %vm560, %v561, %v557
    %v563 = vadd.s32 %v558, %v562
    %v564 = vadd.s32 %v563, 536870912
    %v565 = vshrl.u32 %v564, 30
    %v566 = vshll.u32 %v565, 30
    %v567 = vsub.s32 %v563, %v566
    %vm568 = vcmp.lt.s32.totalorder %v567, 0
    %v569 = vsub.s32 0, %v567
    %v570 = vsel %vm568, %v569, %v567
    %v571 = vclz %v570
    %v572 = vsub.s32 %v571, 2
    %vm573 = vcmp.gt.s32.totalorder 0, %v572
    %v574 = vsel %vm573, 0, %v572
    %v575 = vsub.s32 32, %v574
    %v576 = vshll.u32 %v567, %v574
    %v577 = vshrl.u32 %v559, %v575
    %v578 = vor.u32 %v576, %v577
    %v579 = vsub.s32 4294967266, %v574
    %v580 = vadd.s32 %v579, 127
    %v581 = vshll.u32 %v580, 23
    %v582 = vor.u32 4788187, %v581
    %v583 = vand.u32 2147483647, %v582
    %v585 = vcvt.s32.f32 %v578
    %v586 = vmul.f32 %v585, %v583
    %v587 = vxor.u32 %v586, 2147483648
    %v588 = vsel %vm505, %v587, %v586
    %v589 = vsub.s32 4, %v565
    %v590 = vsel %vm505, %v589, %v565
    %v591 = vsel %vm504, %v186, %v588
    %v592 = vsel %vm504, 0, %v590
    %v593 = vcosq.f32.pop %v591
    %v594 = vsinq.f32.pop %v591
    %vm595 = vweird.f32 %v186
    %v596 = vadd.s32 %v592, 3
    %v597 = vand.u32 %v596, 3
    %vm598 = vcmp.lt.s32.totalorder %v597, 2
    %vm599 = vcmp.eq.s32.totalorder %v597, 0
    %v600 = vxor.u32 %v594, 2147483648
    %v601 = vsel %vm599, %v593, %v600
    %vm602 = vcmp.eq.s32.totalorder %v597, 2
    %v603 = vxor.u32 %v593, 2147483648
    %v604 = vsel %vm602, %v603, %v594
    %v605 = vsel %vm598, %v601, %v604
    %v606 = vsel %vm595, nan, %v605
    %v607 = vand.u32 2147483647, %v187
    %vm608 = vcmp.le.f32.partialorder %v607, 0.7853982
    %vm609 = vcmp.lt.s32.totalorder %v187, 0
    %v610 = vand.u32 %v187, 2139095040
    %v611 = vshrl.u32 %v610, 23
    %v612 = vsub.s32 %v611, 127
    %v613 = vand.u32 2147483647, %v187
    %v614 = vand.u32 %v613, 8388607
    %v615 = vor.u32 %v614, 8388608
    %v616 = vsub.s32 0, %v615
    %v617 = vadd.s32 %v612, 1
    %vm618 = vcmp.gt.s32.totalorder %v617, 0
    %v619 = vsel %vm618, %v617, 0
    %v620 = vshrl.u32 %v619, 5
    %v621 = vand.u32 %v619, 31
    %v622 = vsub.s32 32, %v621
    %v623 = vshrl.u32 683565275, %v622
    %v624 = vshll.u32 683565275, %v621
    %v625 = vshrl.u32 2475754826, %v622
    %v626 = vor.u32 %v624, %v625
    %v627 = vshll.u32 2475754826, %v621
    %v628 = vshrl.u32 2131351028, %v622
    %v629 = vor.u32 %v627, %v628
    %v630 = vshll.u32 2131351028, %v621
    %v631 = vshrl.u32 2102212464, %v622
    %v632 = vor.u32 %v630, %v631
    %v633 = vshll.u32 2102212464, %v621
    %v634 = vshrl.u32 920167782, %v622
    %v635 = vor.u32 %v633, %v634
    %v636 = vshll.u32 920167782, %v621
    %v637 = vshrl.u32 1326507024, %v622
    %v638 = vor.u32 %v636, %v637
    %vm639 = vcmp.lt.s32.totalorder %v620, 1
    %vm640 = vcmp.lt.s32.totalorder %v620, 2
    %vm641 = vcmp.lt.s32.totalorder %v620, 3
    %vm642 = vcmp.lt.s32.totalorder %v620, 4
    %v643 = vsel %vm639, %v623, %v626
    %v644 = vsel %vm642, %v632, 2102212464
    %v645 = vsel %vm641, %v629, %v644
    %v646 = vsel %vm640, %v643, %v645
    %v647 = vsel %vm639, %v626, %v629
    %v648 = vsel %vm642, %v635, 920167782
    %v649 = vsel %vm641, %v632, %v648
    %v650 = vsel %vm640, %v647, %v649
    %v651 = vsel %vm639, %v629, %v632
    %v652 = vsel %vm642, %v638, 1326507024
    %v653 = vsel %vm641, %v635, %v652
    %v654 = vsel %vm640, %v651, %v653
    %v655 = vshll.u32 %v615, 8
    %v656 = vmul.u32.u64.compose %v655, %v654
    %v657 = vextract.low.u32 %v656
    %v658 = vextract.high.u32 %v656
    %v659 = vmul.u32.u64.compose %v655, %v650
    %v660 = vextract.low.u32 %v659
    %v661 = vextract.high.u32 %v659
    %v662 = vmul.u32 %v655, %v646
    %v663 = vadd.s32 %v658, %v660
    %vm664 = vc.u32 %v658, %v660
    %v665 = vadd.s32 %v661, 1
    %v666 = vsel %vm664, %v665, %v661
    %v667 = vadd.s32 %v662, %v666
    %v668 = vadd.s32 %v667, 536870912
    %v669 = vshrl.u32 %v668, 30
    %v670 = vshll.u32 %v669, 30
    %v671 = vsub.s32 %v667, %v670
    %vm672 = vcmp.lt.s32.totalorder %v671, 0
    %v673 = vsub.s32 0, %v671
    %v674 = vsel %vm672, %v673, %v671
    %v675 = vclz %v674
    %v676 = vsub.s32 %v675, 2
    %vm677 = vcmp.gt.s32.totalorder 0, %v676
    %v678 = vsel %vm677, 0, %v676
    %v679 = vsub.s32 32, %v678
    %v680 = vshll.u32 %v671, %v678
    %v681 = vshrl.u32 %v663, %v679
    %v682 = vor.u32 %v680, %v681
    %v683 = vsub.s32 4294967266, %v678
    %v684 = vadd.s32 %v683, 127
    %v685 = vshll.u32 %v684, 23
    %v686 = vor.u32 4788187, %v685
    %v687 = vand.u32 2147483647, %v686
    %v689 = vcvt.s32.f32 %v682
    %v690 = vmul.f32 %v689, %v687
    %v691 = vxor.u32 %v690, 2147483648
    %v692 = vsel %vm609, %v691, %v690
    %v693 = vsub.s32 4, %v669
    %v694 = vsel %vm609, %v693, %v669
    %v695 = vsel %vm608, %v187, %v692
    %v696 = vsel %vm608, 0, %v694
    %v697 = vcosq.f32.pop %v695
    %v698 = vsinq.f32.pop %v695
    %vm699 = vweird.f32 %v187
    %v700 = vadd.s32 %v696, 3
    %v701 = vand.u32 %v700, 3
    %vm702 = vcmp.lt.s32.totalorder %v701, 2
    %vm703 = vcmp.eq.s32.totalorder %v701, 0
    %v704 = vxor.u32 %v698, 2147483648
    %v705 = vsel %vm703, %v697, %v704
    %vm706 = vcmp.eq.s32.totalorder %v701, 2
    %v707 = vxor.u32 %v697, 2147483648
    %v708 = vsel %vm706, %v707, %v698
    %v709 = vsel %vm702, %v705, %v708
    %v710 = vsel %vm699, nan, %v709
    %v711 = vand.u32 2147483647, %v188
    %vm712 = vcmp.le.f32.partialorder %v711, 0.7853982
    %vm713 = vcmp.lt.s32.totalorder %v188, 0
    %v714 = vand.u32 %v188, 2139095040
    %v715 = vshrl.u32 %v714, 23
    %v716 = vsub.s32 %v715, 127
    %v717 = vand.u32 2147483647, %v188
    %v718 = vand.u32 %v717, 8388607
    %v719 = vor.u32 %v718, 8388608
    %v720 = vsub.s32 0, %v719
    %v721 = vadd.s32 %v716, 1
    %vm722 = vcmp.gt.s32.totalorder %v721, 0
    %v723 = vsel %vm722, %v721, 0
    %v724 = vshrl.u32 %v723, 5
    %v725 = vand.u32 %v723, 31
    %v726 = vsub.s32 32, %v725
    %v727 = vshrl.u32 683565275, %v726
    %v728 = vshll.u32 683565275, %v725
    %v729 = vshrl.u32 2475754826, %v726
    %v730 = vor.u32 %v728, %v729
    %v731 = vshll.u32 2475754826, %v725
    %v732 = vshrl.u32 2131351028, %v726
    %v733 = vor.u32 %v731, %v732
    %v734 = vshll.u32 2131351028, %v725
    %v735 = vshrl.u32 2102212464, %v726
    %v736 = vor.u32 %v734, %v735
    %v737 = vshll.u32 2102212464, %v725
    %v738 = vshrl.u32 920167782, %v726
    %v739 = vor.u32 %v737, %v738
    %v740 = vshll.u32 920167782, %v725
    %v741 = vshrl.u32 1326507024, %v726
    %v742 = vor.u32 %v740, %v741
    %vm743 = vcmp.lt.s32.totalorder %v724, 1
    %vm744 = vcmp.lt.s32.totalorder %v724, 2
    %vm745 = vcmp.lt.s32.totalorder %v724, 3
    %vm746 = vcmp.lt.s32.totalorder %v724, 4
    %v747 = vsel %vm743, %v727, %v730
    %v748 = vsel %vm746, %v736, 2102212464
    %v749 = vsel %vm745, %v733, %v748
    %v750 = vsel %vm744, %v747, %v749
    %v751 = vsel %vm743, %v730, %v733
    %v752 = vsel %vm746, %v739, 920167782
    %v753 = vsel %vm745, %v736, %v752
    %v754 = vsel %vm744, %v751, %v753
    %v755 = vsel %vm743, %v733, %v736
    %v756 = vsel %vm746, %v742, 1326507024
    %v757 = vsel %vm745, %v739, %v756
    %v758 = vsel %vm744, %v755, %v757
    %v759 = vshll.u32 %v719, 8
    %v760 = vmul.u32.u64.compose %v759, %v758
    %v761 = vextract.low.u32 %v760
    %v762 = vextract.high.u32 %v760
    %v763 = vmul.u32.u64.compose %v759, %v754
    %v764 = vextract.low.u32 %v763
    %v765 = vextract.high.u32 %v763
    %v766 = vmul.u32 %v759, %v750
    %v767 = vadd.s32 %v762, %v764
    %vm768 = vc.u32 %v762, %v764
    %v769 = vadd.s32 %v765, 1
    %v770 = vsel %vm768, %v769, %v765
    %v771 = vadd.s32 %v766, %v770
    %v772 = vadd.s32 %v771, 536870912
    %v773 = vshrl.u32 %v772, 30
    %v774 = vshll.u32 %v773, 30
    %v775 = vsub.s32 %v771, %v774
    %vm776 = vcmp.lt.s32.totalorder %v775, 0
    %v777 = vsub.s32 0, %v775
    %v778 = vsel %vm776, %v777, %v775
    %v779 = vclz %v778
    %v780 = vsub.s32 %v779, 2
    %vm781 = vcmp.gt.s32.totalorder 0, %v780
    %v782 = vsel %vm781, 0, %v780
    %v783 = vsub.s32 32, %v782
    %v784 = vshll.u32 %v775, %v782
    %v785 = vshrl.u32 %v767, %v783
    %v786 = vor.u32 %v784, %v785
    %v787 = vsub.s32 4294967266, %v782
    %v788 = vadd.s32 %v787, 127
    %v789 = vshll.u32 %v788, 23
    %v790 = vor.u32 4788187, %v789
    %v791 = vand.u32 2147483647, %v790
    %v793 = vcvt.s32.f32 %v786
    %v794 = vmul.f32 %v793, %v791
    %v795 = vxor.u32 %v794, 2147483648
    %v796 = vsel %vm713, %v795, %v794
    %v797 = vsub.s32 4, %v773
    %v798 = vsel %vm713, %v797, %v773
    %v799 = vsel %vm712, %v188, %v796
    %v800 = vsel %vm712, 0, %v798
    %v801 = vcosq.f32.pop %v799
    %v802 = vsinq.f32.pop %v799
    %vm803 = vweird.f32 %v188
    %v804 = vadd.s32 %v800, 3
    %v805 = vand.u32 %v804, 3
    %vm806 = vcmp.lt.s32.totalorder %v805, 2
    %vm807 = vcmp.eq.s32.totalorder %v805, 0
    %v808 = vxor.u32 %v802, 2147483648
    %v809 = vsel %vm807, %v801, %v808
    %vm810 = vcmp.eq.s32.totalorder %v805, 2
    %v811 = vxor.u32 %v801, 2147483648
    %v812 = vsel %vm810, %v811, %v802
    %v813 = vsel %vm806, %v809, %v812
    %v814 = vsel %vm803, nan, %v813
    %v815 = vand.u32 2147483647, %v189
    %vm816 = vcmp.le.f32.partialorder %v815, 0.7853982
    %vm817 = vcmp.lt.s32.totalorder %v189, 0
    %v818 = vand.u32 %v189, 2139095040
    %v819 = vshrl.u32 %v818, 23
    %v820 = vsub.s32 %v819, 127
    %v821 = vand.u32 2147483647, %v189
    %v822 = vand.u32 %v821, 8388607
    %v823 = vor.u32 %v822, 8388608
    %v824 = vsub.s32 0, %v823
    %v825 = vadd.s32 %v820, 1
    %vm826 = vcmp.gt.s32.totalorder %v825, 0
    %v827 = vsel %vm826, %v825, 0
    %v828 = vshrl.u32 %v827, 5
    %v829 = vand.u32 %v827, 31
    %v830 = vsub.s32 32, %v829
    %v831 = vshrl.u32 683565275, %v830
    %v832 = vshll.u32 683565275, %v829
    %v833 = vshrl.u32 2475754826, %v830
    %v834 = vor.u32 %v832, %v833
    %v835 = vshll.u32 2475754826, %v829
    %v836 = vshrl.u32 2131351028, %v830
    %v837 = vor.u32 %v835, %v836
    %v838 = vshll.u32 2131351028, %v829
    %v839 = vshrl.u32 2102212464, %v830
    %v840 = vor.u32 %v838, %v839
    %v841 = vshll.u32 2102212464, %v829
    %v842 = vshrl.u32 920167782, %v830
    %v843 = vor.u32 %v841, %v842
    %v844 = vshll.u32 920167782, %v829
    %v845 = vshrl.u32 1326507024, %v830
    %v846 = vor.u32 %v844, %v845
    %vm847 = vcmp.lt.s32.totalorder %v828, 1
    %vm848 = vcmp.lt.s32.totalorder %v828, 2
    %vm849 = vcmp.lt.s32.totalorder %v828, 3
    %vm850 = vcmp.lt.s32.totalorder %v828, 4
    %v851 = vsel %vm847, %v831, %v834
    %v852 = vsel %vm850, %v840, 2102212464
    %v853 = vsel %vm849, %v837, %v852
    %v854 = vsel %vm848, %v851, %v853
    %v855 = vsel %vm847, %v834, %v837
    %v856 = vsel %vm850, %v843, 920167782
    %v857 = vsel %vm849, %v840, %v856
    %v858 = vsel %vm848, %v855, %v857
    %v859 = vsel %vm847, %v837, %v840
    %v860 = vsel %vm850, %v846, 1326507024
    %v861 = vsel %vm849, %v843, %v860
    %v862 = vsel %vm848, %v859, %v861
    %v863 = vshll.u32 %v823, 8
    %v864 = vmul.u32.u64.compose %v863, %v862
    %v865 = vextract.low.u32 %v864
    %v866 = vextract.high.u32 %v864
    %v867 = vmul.u32.u64.compose %v863, %v858
    %v868 = vextract.low.u32 %v867
    %v869 = vextract.high.u32 %v867
    %v870 = vmul.u32 %v863, %v854
    %v871 = vadd.s32 %v866, %v868
    %vm872 = vc.u32 %v866, %v868
    %v873 = vadd.s32 %v869, 1
    %v874 = vsel %vm872, %v873, %v869
    %v875 = vadd.s32 %v870, %v874
    %v876 = vadd.s32 %v875, 536870912
    %v877 = vshrl.u32 %v876, 30
    %v878 = vshll.u32 %v877, 30
    %v879 = vsub.s32 %v875, %v878
    %vm880 = vcmp.lt.s32.totalorder %v879, 0
    %v881 = vsub.s32 0, %v879
    %v882 = vsel %vm880, %v881, %v879
    %v883 = vclz %v882
    %v884 = vsub.s32 %v883, 2
    %vm885 = vcmp.gt.s32.totalorder 0, %v884
    %v886 = vsel %vm885, 0, %v884
    %v887 = vsub.s32 32, %v886
    %v888 = vshll.u32 %v879, %v886
    %v889 = vshrl.u32 %v871, %v887
    %v890 = vor.u32 %v888, %v889
    %v891 = vsub.s32 4294967266, %v886
    %v892 = vadd.s32 %v891, 127
    %v893 = vshll.u32 %v892, 23
    %v894 = vor.u32 4788187, %v893
    %v895 = vand.u32 2147483647, %v894
    %v897 = vcvt.s32.f32 %v890
    %v898 = vmul.f32 %v897, %v895
    %v899 = vxor.u32 %v898, 2147483648
    %v900 = vsel %vm817, %v899, %v898
    %v901 = vsub.s32 4, %v877
    %v902 = vsel %vm817, %v901, %v877
    %v903 = vsel %vm816, %v189, %v900
    %v904 = vsel %vm816, 0, %v902
    %v905 = vcosq.f32.pop %v903
    %v906 = vsinq.f32.pop %v903
    %vm907 = vweird.f32 %v189
    %v908 = vadd.s32 %v904, 3
    %v909 = vand.u32 %v908, 3
    %vm910 = vcmp.lt.s32.totalorder %v909, 2
    %vm911 = vcmp.eq.s32.totalorder %v909, 0
    %v912 = vxor.u32 %v906, 2147483648
    %v913 = vsel %vm911, %v905, %v912
    %vm914 = vcmp.eq.s32.totalorder %v909, 2
    %v915 = vxor.u32 %v905, 2147483648
    %v916 = vsel %vm914, %v915, %v906
    %v917 = vsel %vm910, %v913, %v916
    %v918 = vsel %vm907, nan, %v917
    %v919 = vand.u32 2147483647, %v190
    %vm920 = vcmp.le.f32.partialorder %v919, 0.7853982
    %vm921 = vcmp.lt.s32.totalorder %v190, 0
    %v922 = vand.u32 %v190, 2139095040
    %v923 = vshrl.u32 %v922, 23
    %v924 = vsub.s32 %v923, 127
    %v925 = vand.u32 2147483647, %v190
    %v926 = vand.u32 %v925, 8388607
    %v927 = vor.u32 %v926, 8388608
    %v928 = vsub.s32 0, %v927
    %v929 = vadd.s32 %v924, 1
    %vm930 = vcmp.gt.s32.totalorder %v929, 0
    %v931 = vsel %vm930, %v929, 0
    %v932 = vshrl.u32 %v931, 5
    %v933 = vand.u32 %v931, 31
    %v934 = vsub.s32 32, %v933
    %v935 = vshrl.u32 683565275, %v934
    %v936 = vshll.u32 683565275, %v933
    %v937 = vshrl.u32 2475754826, %v934
    %v938 = vor.u32 %v936, %v937
    %v939 = vshll.u32 2475754826, %v933
    %v940 = vshrl.u32 2131351028, %v934
    %v941 = vor.u32 %v939, %v940
    %v942 = vshll.u32 2131351028, %v933
    %v943 = vshrl.u32 2102212464, %v934
    %v944 = vor.u32 %v942, %v943
    %v945 = vshll.u32 2102212464, %v933
    %v946 = vshrl.u32 920167782, %v934
    %v947 = vor.u32 %v945, %v946
    %v948 = vshll.u32 920167782, %v933
    %v949 = vshrl.u32 1326507024, %v934
    %v950 = vor.u32 %v948, %v949
    %vm951 = vcmp.lt.s32.totalorder %v932, 1
    %vm952 = vcmp.lt.s32.totalorder %v932, 2
    %vm953 = vcmp.lt.s32.totalorder %v932, 3
    %vm954 = vcmp.lt.s32.totalorder %v932, 4
    %v955 = vsel %vm951, %v935, %v938
    %v956 = vsel %vm954, %v944, 2102212464
    %v957 = vsel %vm953, %v941, %v956
    %v958 = vsel %vm952, %v955, %v957
    %v959 = vsel %vm951, %v938, %v941
    %v960 = vsel %vm954, %v947, 920167782
    %v961 = vsel %vm953, %v944, %v960
    %v962 = vsel %vm952, %v959, %v961
    %v963 = vsel %vm951, %v941, %v944
    %v964 = vsel %vm954, %v950, 1326507024
    %v965 = vsel %vm953, %v947, %v964
    %v966 = vsel %vm952, %v963, %v965
    %v967 = vshll.u32 %v927, 8
    %v968 = vmul.u32.u64.compose %v967, %v966
    %v969 = vextract.low.u32 %v968
    %v970 = vextract.high.u32 %v968
    %v971 = vmul.u32.u64.compose %v967, %v962
    %v972 = vextract.low.u32 %v971
    %v973 = vextract.high.u32 %v971
    %v974 = vmul.u32 %v967, %v958
    %v975 = vadd.s32 %v970, %v972
    %vm976 = vc.u32 %v970, %v972
    %v977 = vadd.s32 %v973, 1
    %v978 = vsel %vm976, %v977, %v973
    %v979 = vadd.s32 %v974, %v978
    %v980 = vadd.s32 %v979, 536870912
    %v981 = vshrl.u32 %v980, 30
    %v982 = vshll.u32 %v981, 30
    %v983 = vsub.s32 %v979, %v982
    %vm984 = vcmp.lt.s32.totalorder %v983, 0
    %v985 = vsub.s32 0, %v983
    %v986 = vsel %vm984, %v985, %v983
    %v987 = vclz %v986
    %v988 = vsub.s32 %v987, 2
    %vm989 = vcmp.gt.s32.totalorder 0, %v988
    %v990 = vsel %vm989, 0, %v988
    %v991 = vsub.s32 32, %v990
    %v992 = vshll.u32 %v983, %v990
    %v993 = vshrl.u32 %v975, %v991
    %v994 = vor.u32 %v992, %v993
    %v995 = vsub.s32 4294967266, %v990
    %v996 = vadd.s32 %v995, 127
    %v997 = vshll.u32 %v996, 23
    %v998 = vor.u32 4788187, %v997
    %v999 = vand.u32 2147483647, %v998
    %v1001 = vcvt.s32.f32 %v994
    %v1002 = vmul.f32 %v1001, %v999
    %v1003 = vxor.u32 %v1002, 2147483648
    %v1004 = vsel %vm921, %v1003, %v1002
    %v1005 = vsub.s32 4, %v981
    %v1006 = vsel %vm921, %v1005, %v981
    %v1007 = vsel %vm920, %v190, %v1004
    %v1008 = vsel %vm920, 0, %v1006
    %v1009 = vcosq.f32.pop %v1007
    %v1010 = vsinq.f32.pop %v1007
    %vm1011 = vweird.f32 %v190
    %v1012 = vadd.s32 %v1008, 3
    %v1013 = vand.u32 %v1012, 3
    %vm1014 = vcmp.lt.s32.totalorder %v1013, 2
    %vm1015 = vcmp.eq.s32.totalorder %v1013, 0
    %v1016 = vxor.u32 %v1010, 2147483648
    %v1017 = vsel %vm1015, %v1009, %v1016
    %vm1018 = vcmp.eq.s32.totalorder %v1013, 2
    %v1019 = vxor.u32 %v1009, 2147483648
    %v1020 = vsel %vm1018, %v1019, %v1010
    %v1021 = vsel %vm1014, %v1017, %v1020
    %v1022 = vsel %vm1011, nan, %v1021
    %v1023 = vld [vmem:[%s2] sm:$0xf]
    %v1024 = vld [vmem:[%s2 + $0x4] sm:$0xf]
    %v1025 = vld [vmem:[%s2 + $0x8] sm:$0xf]
    %v1026 = vld [vmem:[%s2 + $0xc] sm:$0xf]
    %v1027 = vld [vmem:[%s2 + $0x10] sm:$0xf]
    %v1028 = vld [vmem:[%s2 + $0x14] sm:$0xf]
    %v1029 = vld [vmem:[%s2 + $0x18] sm:$0xf]
    %v1030 = vld [vmem:[%s2 + $0x1c] sm:$0xf]
    %v1031 = vld [vmem:[%s2 + $0x20] sm:$0xf]
    %v1032 = vld [vmem:[%s2 + $0x24] sm:$0xf]
    %v1033 = vld [vmem:[%s2 + $0x28] sm:$0xf]
    %v1034 = vld [vmem:[%s2 + $0x2c] sm:$0xf]
    %v1035 = vld [vmem:[%s2 + $0x30] sm:$0xf]
    %v1036 = vld [vmem:[%s2 + $0x34] sm:$0xf]
    %v1037 = vld [vmem:[%s2 + $0x38] sm:$0xf]
    %v1038 = vld [vmem:[%s2 + $0x3c] sm:$0xf]
    %v1039 = vpack.c.bf16 %v398, %v294
    %v1040 = vpack.c.bf16 %v606, %v502
    %v1041 = vpack.c.bf16 %v814, %v710
    %v1042 = vpack.c.bf16 %v1022, %v918
    %1044 = vset.pattern.permute.xlu0 0
    %1045 = vperm.xlu0 %1044, %v31
    %v1046 = vpop.permute.xlu0 %1045
    %1049 = vset.pattern.permute.xlu0 0
    %1050 = vperm.xlu0 %1049, %v32
    %v1051 = vpop.permute.xlu0 %1050
    %1054 = vset.pattern.permute.xlu0 0
    %1055 = vperm.xlu0 %1054, %v33
    %v1056 = vpop.permute.xlu0 %1055
    %1059 = vset.pattern.permute.xlu0 0
    %1060 = vperm.xlu0 %1059, %v34
    %v1061 = vpop.permute.xlu0 %1060
    %1064 = vset.pattern.permute.xlu0 0
    %1065 = vperm.xlu0 %1064, %v35
    %v1066 = vpop.permute.xlu0 %1065
    %1069 = vset.pattern.permute.xlu0 0
    %1070 = vperm.xlu0 %1069, %v36
    %v1071 = vpop.permute.xlu0 %1070
    %1074 = vset.pattern.permute.xlu0 0
    %1075 = vperm.xlu0 %1074, %v37
    %v1076 = vpop.permute.xlu0 %1075
    %1079 = vset.pattern.permute.xlu0 0
    %1080 = vperm.xlu0 %1079, %v38
    %v1081 = vpop.permute.xlu0 %1080
    %1084 = vset.pattern.permute.xlu0 0
    %1085 = vperm.xlu0 %1084, %v39
    %v1086 = vpop.permute.xlu0 %1085
    %1089 = vset.pattern.permute.xlu0 0
    %1090 = vperm.xlu0 %1089, %v40
    %v1091 = vpop.permute.xlu0 %1090
    %1094 = vset.pattern.permute.xlu0 0
    %1095 = vperm.xlu0 %1094, %v41
    %v1096 = vpop.permute.xlu0 %1095
    %1099 = vset.pattern.permute.xlu0 0
    %1100 = vperm.xlu0 %1099, %v42
    %v1101 = vpop.permute.xlu0 %1100
    %1104 = vset.pattern.permute.xlu0 0
    %1105 = vperm.xlu0 %1104, %v43
    %v1106 = vpop.permute.xlu0 %1105
    %1109 = vset.pattern.permute.xlu0 0
    %1110 = vperm.xlu0 %1109, %v44
    %v1111 = vpop.permute.xlu0 %1110
    %1114 = vset.pattern.permute.xlu0 0
    %1115 = vperm.xlu0 %1114, %v45
    %v1116 = vpop.permute.xlu0 %1115
    %1119 = vset.pattern.permute.xlu0 0
    %1120 = vperm.xlu0 %1119, %v46
    %v1121 = vpop.permute.xlu0 %1120
    %v1139 = vunpack.c.l.b16 %v1023
    %v1140 = vunpack.c.l.b16 %v1024
    %v1141 = vunpack.c.l.b16 %v1025
    %v1142 = vunpack.c.l.b16 %v1026
    %v1143 = vunpack.c.l.b16 %v1027
    %v1144 = vunpack.c.l.b16 %v1028
    %v1145 = vunpack.c.l.b16 %v1029
    %v1146 = vunpack.c.l.b16 %v1030
    %v1147 = vunpack.c.l.b16 %v1031
    %v1148 = vunpack.c.l.b16 %v1032
    %v1149 = vunpack.c.l.b16 %v1033
    %v1150 = vunpack.c.l.b16 %v1034
    %v1151 = vunpack.c.l.b16 %v1035
    %v1152 = vunpack.c.l.b16 %v1036
    %v1153 = vunpack.c.l.b16 %v1037
    %v1154 = vunpack.c.l.b16 %v1038
    %v1155 = vpack.c.b16 %v1140, %v1139
    %v1156 = vpack.c.b16 %v1142, %v1141
    %v1157 = vpack.c.b16 %v1144, %v1143
    %v1158 = vpack.c.b16 %v1146, %v1145
    %v1159 = vpack.c.b16 %v1148, %v1147
    %v1160 = vpack.c.b16 %v1150, %v1149
    %v1161 = vpack.c.b16 %v1152, %v1151
    %v1162 = vpack.c.b16 %v1154, %v1153
    %vm1163 = vcmask 523264
    %v1165 = vsel %vm1163, %v1155, 0
    %v1168 = vsel %vm1163, %v1156, 0
    %v1171 = vsel %vm1163, %v1157, 0
    %v1174 = vsel %vm1163, %v1158, 0
    %v1177 = vsel %vm1163, %v1159, 0
    %v1180 = vsel %vm1163, %v1160, 0
    %v1183 = vsel %vm1163, %v1161, 0
    %v1186 = vsel %vm1163, %v1162, 0
    %1188 = vmatprep.subr.bf16.mxu0 0
    %1189 = vmatpush1.bf16.msra.mxu0 %v1039
    %1190 = vmatprep.subr.bf16.mxu0 0
    %1191 = vmatpush1.bf16.msra.mxu0 %v1040
    %1192 = vmatprep.subr.bf16.mxu0 0
    %1193 = vmatpush1.bf16.msra.mxu0 %v1041
    %1194 = vmatprep.subr.bf16.mxu0 0
    %1195 = vmatpush1.bf16.msra.mxu0 %v1042
    %1196 = vmatprep.subr.bf16.mxu0 0
    %1197 = vmatpush1.bf16.msra.mxu0 0
    %1198 = vmatprep.subr.bf16.mxu0 0
    %1199 = vmatpush1.bf16.msra.mxu0 0
    %1200 = vmatprep.subr.bf16.mxu0 0
    %1201 = vmatpush1.bf16.msra.mxu0 0
    %1202 = vmatprep.subr.bf16.mxu0 0
    %1203 = vmatpush1.bf16.msra.mxu0 0
    %1204 = vmatprep.subr.bf16.mxu0 0
    %1205 = vmatpush1.bf16.msra.mxu0 0
    %1206 = vmatprep.subr.bf16.mxu0 0
    %1207 = vmatpush1.bf16.msra.mxu0 0
    %1208 = vmatprep.subr.bf16.mxu0 0
    %1209 = vmatpush1.bf16.msra.mxu0 0
    %1210 = vmatprep.subr.bf16.mxu0 0
    %1211 = vmatpush1.bf16.msra.mxu0 0
    %1212 = vmatprep.subr.bf16.mxu0 0
    %1213 = vmatpush1.bf16.msra.mxu0 0
    %1214 = vmatprep.subr.bf16.mxu0 0
    %1215 = vmatpush1.bf16.msra.mxu0 0
    %1216 = vmatprep.subr.bf16.mxu0 0
    %1217 = vmatpush1.bf16.msra.mxu0 0
    %1218 = vmatprep.subr.bf16.mxu0 0
    %1219 = vmatpush1.bf16.msra.mxu0 0
    %1220 = vmatprep.mubr.bf16.mxu0 0
    %1221 = vmatmul.mubr.bf16.gmra.mrb[0].mxu0 %v1165
    %v1222 = vpop.f32.mrb[0].mxu0
    %v1223 = vadd.f32 %v1046, %v1222
    %v1224 = vpop.f32.mrb[0].mxu0
    %v1225 = vpop.f32.mrb[0].mxu0
    %v1226 = vadd.f32 %v1051, %v1225
    %v1227 = vpop.f32.mrb[0].mxu0
    %1228 = vmatprep.mubr.bf16.mxu0 0
    %1229 = vmatmul.mubr.bf16.gmra.mrb[0].mxu0 %v1168
    %v1230 = vpop.f32.mrb[0].mxu0
    %v1231 = vadd.f32 %v1056, %v1230
    %v1232 = vpop.f32.mrb[0].mxu0
    %v1233 = vpop.f32.mrb[0].mxu0
    %v1234 = vadd.f32 %v1061, %v1233
    %v1235 = vpop.f32.mrb[0].mxu0
    %1236 = vmatprep.mubr.bf16.mxu0 0
    %1237 = vmatmul.mubr.bf16.gmra.mrb[0].mxu0 %v1171
    %v1238 = vpop.f32.mrb[0].mxu0
    %v1239 = vadd.f32 %v1066, %v1238
    %v1240 = vpop.f32.mrb[0].mxu0
    %v1241 = vpop.f32.mrb[0].mxu0
    %v1242 = vadd.f32 %v1071, %v1241
    %v1243 = vpop.f32.mrb[0].mxu0
    %1244 = vmatprep.mubr.bf16.mxu0 0
    %1245 = vmatmul.mubr.bf16.gmra.mrb[0].mxu0 %v1174
    %v1246 = vpop.f32.mrb[0].mxu0
    %v1247 = vadd.f32 %v1076, %v1246
    %v1248 = vpop.f32.mrb[0].mxu0
    %v1249 = vpop.f32.mrb[0].mxu0
    %v1250 = vadd.f32 %v1081, %v1249
    %v1251 = vpop.f32.mrb[0].mxu0
    %1252 = vmatprep.mubr.bf16.mxu0 0
    %1253 = vmatmul.mubr.bf16.gmra.mrb[0].mxu0 %v1177
    %v1254 = vpop.f32.mrb[0].mxu0
    %v1255 = vadd.f32 %v1086, %v1254
    %v1256 = vpop.f32.mrb[0].mxu0
    %v1257 = vpop.f32.mrb[0].mxu0
    %v1258 = vadd.f32 %v1091, %v1257
    %v1259 = vpop.f32.mrb[0].mxu0
    %1260 = vmatprep.mubr.bf16.mxu0 0
    %1261 = vmatmul.mubr.bf16.gmra.mrb[0].mxu0 %v1180
    %v1262 = vpop.f32.mrb[0].mxu0
    %v1263 = vadd.f32 %v1096, %v1262
    %v1264 = vpop.f32.mrb[0].mxu0
    %v1265 = vpop.f32.mrb[0].mxu0
    %v1266 = vadd.f32 %v1101, %v1265
    %v1267 = vpop.f32.mrb[0].mxu0
    %1268 = vmatprep.mubr.bf16.mxu0 0
    %1269 = vmatmul.mubr.bf16.gmra.mrb[0].mxu0 %v1183
    %v1270 = vpop.f32.mrb[0].mxu0
    %v1271 = vadd.f32 %v1106, %v1270
    %v1272 = vpop.f32.mrb[0].mxu0
    %v1273 = vpop.f32.mrb[0].mxu0
    %v1274 = vadd.f32 %v1111, %v1273
    %v1275 = vpop.f32.mrb[0].mxu0
    %1276 = vmatprep.mubr.bf16.mxu0 0
    %1277 = vmatmul.mubr.bf16.gmra.mrb[0].mxu0 %v1186
    %v1278 = vpop.f32.mrb[0].mxu0
    %v1279 = vadd.f32 %v1116, %v1278
    %v1280 = vpop.f32.mrb[0].mxu0
    %v1281 = vpop.f32.mrb[0].mxu0
    %v1282 = vadd.f32 %v1121, %v1281
    %v1283 = vpop.f32.mrb[0].mxu0
    %1284 = vdwg.mxu0
    %v1285 = vmax.f32 %v1223, 0.0
    %v1286 = vmax.f32 %v1226, 0.0
    %v1287 = vmax.f32 %v1231, 0.0
    %v1288 = vmax.f32 %v1234, 0.0
    %v1289 = vmax.f32 %v1239, 0.0
    %v1290 = vmax.f32 %v1242, 0.0
    %v1291 = vmax.f32 %v1247, 0.0
    %v1292 = vmax.f32 %v1250, 0.0
    %v1293 = vmax.f32 %v1255, 0.0
    %v1294 = vmax.f32 %v1258, 0.0
    %v1295 = vmax.f32 %v1263, 0.0
    %v1296 = vmax.f32 %v1266, 0.0
    %v1297 = vmax.f32 %v1271, 0.0
    %v1298 = vmax.f32 %v1274, 0.0
    %v1299 = vmax.f32 %v1279, 0.0
    %v1300 = vmax.f32 %v1282, 0.0
    %v1301 = vld [vmem:[%s3] sm:$0xf]
    %v1302 = vld [vmem:[%s3 + $0x4] sm:$0xf]
    %v1303 = vld [vmem:[%s3 + $0x8] sm:$0xf]
    %v1304 = vld [vmem:[%s3 + $0xc] sm:$0xf]
    %v1305 = vld [vmem:[%s3 + $0x10] sm:$0xf]
    %v1306 = vld [vmem:[%s3 + $0x14] sm:$0xf]
    %v1307 = vld [vmem:[%s3 + $0x18] sm:$0xf]
    %v1308 = vld [vmem:[%s3 + $0x1c] sm:$0xf]
    %v1309 = vld [vmem:[%s3 + $0x20] sm:$0xf]
    %v1310 = vld [vmem:[%s3 + $0x24] sm:$0xf]
    %v1311 = vld [vmem:[%s3 + $0x28] sm:$0xf]
    %v1312 = vld [vmem:[%s3 + $0x2c] sm:$0xf]
    %v1313 = vld [vmem:[%s3 + $0x30] sm:$0xf]
    %v1314 = vld [vmem:[%s3 + $0x34] sm:$0xf]
    %v1315 = vld [vmem:[%s3 + $0x38] sm:$0xf]
    %v1316 = vld [vmem:[%s3 + $0x3c] sm:$0xf]
    %v1317 = vpack.c.bf16 %v1286, %v1285
    %v1318 = vpack.c.bf16 %v1288, %v1287
    %v1319 = vpack.c.bf16 %v1290, %v1289
    %v1320 = vpack.c.bf16 %v1292, %v1291
    %v1321 = vpack.c.bf16 %v1294, %v1293
    %v1322 = vpack.c.bf16 %v1296, %v1295
    %v1323 = vpack.c.bf16 %v1298, %v1297
    %v1324 = vpack.c.bf16 %v1300, %v1299
    %1325 = vset.pattern.permute.xlu0 1
    %1326 = vperm.xlu0 %1325, %v31
    %v1327 = vpop.permute.xlu0 %1326
    %1329 = vset.pattern.permute.xlu0 1
    %1330 = vperm.xlu0 %1329, %v32
    %v1331 = vpop.permute.xlu0 %1330
    %1333 = vset.pattern.permute.xlu0 1
    %1334 = vperm.xlu0 %1333, %v33
    %v1335 = vpop.permute.xlu0 %1334
    %1337 = vset.pattern.permute.xlu0 1
    %1338 = vperm.xlu0 %1337, %v34
    %v1339 = vpop.permute.xlu0 %1338
    %1341 = vset.pattern.permute.xlu0 1
    %1342 = vperm.xlu0 %1341, %v35
    %v1343 = vpop.permute.xlu0 %1342
    %1345 = vset.pattern.permute.xlu0 1
    %1346 = vperm.xlu0 %1345, %v36
    %v1347 = vpop.permute.xlu0 %1346
    %1349 = vset.pattern.permute.xlu0 1
    %1350 = vperm.xlu0 %1349, %v37
    %v1351 = vpop.permute.xlu0 %1350
    %1353 = vset.pattern.permute.xlu0 1
    %1354 = vperm.xlu0 %1353, %v38
    %v1355 = vpop.permute.xlu0 %1354
    %1357 = vset.pattern.permute.xlu0 1
    %1358 = vperm.xlu0 %1357, %v39
    %v1359 = vpop.permute.xlu0 %1358
    %1361 = vset.pattern.permute.xlu0 1
    %1362 = vperm.xlu0 %1361, %v40
    %v1363 = vpop.permute.xlu0 %1362
    %1365 = vset.pattern.permute.xlu0 1
    %1366 = vperm.xlu0 %1365, %v41
    %v1367 = vpop.permute.xlu0 %1366
    %1369 = vset.pattern.permute.xlu0 1
    %1370 = vperm.xlu0 %1369, %v42
    %v1371 = vpop.permute.xlu0 %1370
    %1373 = vset.pattern.permute.xlu0 1
    %1374 = vperm.xlu0 %1373, %v43
    %v1375 = vpop.permute.xlu0 %1374
    %1377 = vset.pattern.permute.xlu0 1
    %1378 = vperm.xlu0 %1377, %v44
    %v1379 = vpop.permute.xlu0 %1378
    %1381 = vset.pattern.permute.xlu0 1
    %1382 = vperm.xlu0 %1381, %v45
    %v1383 = vpop.permute.xlu0 %1382
    %1385 = vset.pattern.permute.xlu0 1
    %1386 = vperm.xlu0 %1385, %v46
    %v1387 = vpop.permute.xlu0 %1386
    %v1405 = vunpack.c.l.b16 %v1301
    %v1406 = vunpack.c.l.b16 %v1302
    %v1407 = vunpack.c.l.b16 %v1303
    %v1408 = vunpack.c.l.b16 %v1304
    %v1409 = vunpack.c.l.b16 %v1305
    %v1410 = vunpack.c.l.b16 %v1306
    %v1411 = vunpack.c.l.b16 %v1307
    %v1412 = vunpack.c.l.b16 %v1308
    %v1413 = vunpack.c.l.b16 %v1309
    %v1414 = vunpack.c.l.b16 %v1310
    %v1415 = vunpack.c.l.b16 %v1311
    %v1416 = vunpack.c.l.b16 %v1312
    %v1417 = vunpack.c.l.b16 %v1313
    %v1418 = vunpack.c.l.b16 %v1314
    %v1419 = vunpack.c.l.b16 %v1315
    %v1420 = vunpack.c.l.b16 %v1316
    %v1421 = vpack.c.b16 %v1406, %v1405
    %v1422 = vpack.c.b16 %v1408, %v1407
    %v1423 = vpack.c.b16 %v1410, %v1409
    %v1424 = vpack.c.b16 %v1412, %v1411
    %v1425 = vpack.c.b16 %v1414, %v1413
    %v1426 = vpack.c.b16 %v1416, %v1415
    %v1427 = vpack.c.b16 %v1418, %v1417
    %v1428 = vpack.c.b16 %v1420, %v1419
    %1437 = vmatprep.subr.bf16.mxu0 0
    %1438 = vmatpush1.bf16.msra.mxu0 %v1317
    %1439 = vmatprep.subr.bf16.mxu0 0
    %1440 = vmatpush1.bf16.msra.mxu0 %v1318
    %1441 = vmatprep.subr.bf16.mxu0 0
    %1442 = vmatpush1.bf16.msra.mxu0 %v1319
    %1443 = vmatprep.subr.bf16.mxu0 0
    %1444 = vmatpush1.bf16.msra.mxu0 %v1320
    %1445 = vmatprep.subr.bf16.mxu0 0
    %1446 = vmatpush1.bf16.msra.mxu0 %v1321
    %1447 = vmatprep.subr.bf16.mxu0 0
    %1448 = vmatpush1.bf16.msra.mxu0 %v1322
    %1449 = vmatprep.subr.bf16.mxu0 0
    %1450 = vmatpush1.bf16.msra.mxu0 %v1323
    %1451 = vmatprep.subr.bf16.mxu0 0
    %1452 = vmatpush1.bf16.msra.mxu0 %v1324
    %1453 = vmatprep.subr.bf16.mxu0 0
    %1454 = vmatpush1.bf16.msra.mxu0 0
    %1455 = vmatprep.subr.bf16.mxu0 0
    %1456 = vmatpush1.bf16.msra.mxu0 0
    %1457 = vmatprep.subr.bf16.mxu0 0
    %1458 = vmatpush1.bf16.msra.mxu0 0
    %1459 = vmatprep.subr.bf16.mxu0 0
    %1460 = vmatpush1.bf16.msra.mxu0 0
    %1461 = vmatprep.subr.bf16.mxu0 0
    %1462 = vmatpush1.bf16.msra.mxu0 0
    %1463 = vmatprep.subr.bf16.mxu0 0
    %1464 = vmatpush1.bf16.msra.mxu0 0
    %1465 = vmatprep.subr.bf16.mxu0 0
    %1466 = vmatpush1.bf16.msra.mxu0 0
    %1467 = vmatprep.subr.bf16.mxu0 0
    %1468 = vmatpush1.bf16.msra.mxu0 0
    %1469 = vmatprep.mubr.bf16.mxu0 0
    %1470 = vmatmul.mubr.bf16.gmra.mrb[0].mxu0 %v1421
    %v1471 = vpop.f32.mrb[0].mxu0
    %v1472 = vadd.f32 %v1327, %v1471
    %v1473 = vpop.f32.mrb[0].mxu0
    %v1474 = vpop.f32.mrb[0].mxu0
    %v1475 = vadd.f32 %v1331, %v1474
    %v1476 = vpop.f32.mrb[0].mxu0
    %1477 = vmatprep.mubr.bf16.mxu0 0
    %1478 = vmatmul.mubr.bf16.gmra.mrb[0].mxu0 %v1422
    %v1479 = vpop.f32.mrb[0].mxu0
    %v1480 = vadd.f32 %v1335, %v1479
    %v1481 = vpop.f32.mrb[0].mxu0
    %v1482 = vpop.f32.mrb[0].mxu0
    %v1483 = vadd.f32 %v1339, %v1482
    %v1484 = vpop.f32.mrb[0].mxu0
    %1485 = vmatprep.mubr.bf16.mxu0 0
    %1486 = vmatmul.mubr.bf16.gmra.mrb[0].mxu0 %v1423
    %v1487 = vpop.f32.mrb[0].mxu0
    %v1488 = vadd.f32 %v1343, %v1487
    %v1489 = vpop.f32.mrb[0].mxu0
    %v1490 = vpop.f32.mrb[0].mxu0
    %v1491 = vadd.f32 %v1347, %v1490
    %v1492 = vpop.f32.mrb[0].mxu0
    %1493 = vmatprep.mubr.bf16.mxu0 0
    %1494 = vmatmul.mubr.bf16.gmra.mrb[0].mxu0 %v1424
    %v1495 = vpop.f32.mrb[0].mxu0
    %v1496 = vadd.f32 %v1351, %v1495
    %v1497 = vpop.f32.mrb[0].mxu0
    %v1498 = vpop.f32.mrb[0].mxu0
    %v1499 = vadd.f32 %v1355, %v1498
    %v1500 = vpop.f32.mrb[0].mxu0
    %1501 = vmatprep.mubr.bf16.mxu0 0
    %1502 = vmatmul.mubr.bf16.gmra.mrb[0].mxu0 %v1425
    %v1503 = vpop.f32.mrb[0].mxu0
    %v1504 = vadd.f32 %v1359, %v1503
    %v1505 = vpop.f32.mrb[0].mxu0
    %v1506 = vpop.f32.mrb[0].mxu0
    %v1507 = vadd.f32 %v1363, %v1506
    %v1508 = vpop.f32.mrb[0].mxu0
    %1509 = vmatprep.mubr.bf16.mxu0 0
    %1510 = vmatmul.mubr.bf16.gmra.mrb[0].mxu0 %v1426
    %v1511 = vpop.f32.mrb[0].mxu0
    %v1512 = vadd.f32 %v1367, %v1511
    %v1513 = vpop.f32.mrb[0].mxu0
    %v1514 = vpop.f32.mrb[0].mxu0
    %v1515 = vadd.f32 %v1371, %v1514
    %v1516 = vpop.f32.mrb[0].mxu0
    %1517 = vmatprep.mubr.bf16.mxu0 0
    %1518 = vmatmul.mubr.bf16.gmra.mrb[0].mxu0 %v1427
    %v1519 = vpop.f32.mrb[0].mxu0
    %v1520 = vadd.f32 %v1375, %v1519
    %v1521 = vpop.f32.mrb[0].mxu0
    %v1522 = vpop.f32.mrb[0].mxu0
    %v1523 = vadd.f32 %v1379, %v1522
    %v1524 = vpop.f32.mrb[0].mxu0
    %1525 = vmatprep.mubr.bf16.mxu0 0
    %1526 = vmatmul.mubr.bf16.gmra.mrb[0].mxu0 %v1428
    %v1527 = vpop.f32.mrb[0].mxu0
    %v1528 = vadd.f32 %v1383, %v1527
    %v1529 = vpop.f32.mrb[0].mxu0
    %v1530 = vpop.f32.mrb[0].mxu0
    %v1531 = vadd.f32 %v1387, %v1530
    %v1532 = vpop.f32.mrb[0].mxu0
    %1533 = vdwg.mxu0
    %v1534 = vmax.f32 %v1472, 0.0
    %v1535 = vmax.f32 %v1475, 0.0
    %v1536 = vmax.f32 %v1480, 0.0
    %v1537 = vmax.f32 %v1483, 0.0
    %v1538 = vmax.f32 %v1488, 0.0
    %v1539 = vmax.f32 %v1491, 0.0
    %v1540 = vmax.f32 %v1496, 0.0
    %v1541 = vmax.f32 %v1499, 0.0
    %v1542 = vmax.f32 %v1504, 0.0
    %v1543 = vmax.f32 %v1507, 0.0
    %v1544 = vmax.f32 %v1512, 0.0
    %v1545 = vmax.f32 %v1515, 0.0
    %v1546 = vmax.f32 %v1520, 0.0
    %v1547 = vmax.f32 %v1523, 0.0
    %v1548 = vmax.f32 %v1528, 0.0
    %v1549 = vmax.f32 %v1531, 0.0
    %1550 = vset.pattern.permute.xlu0 2
    %1551 = vperm.xlu0 %1550, %v31
    %v1552 = vpop.permute.xlu0 %1551
    %1554 = vset.pattern.permute.xlu0 2
    %1555 = vperm.xlu0 %1554, %v32
    %v1556 = vpop.permute.xlu0 %1555
    %1558 = vset.pattern.permute.xlu0 2
    %1559 = vperm.xlu0 %1558, %v33
    %v1560 = vpop.permute.xlu0 %1559
    %1562 = vset.pattern.permute.xlu0 2
    %1563 = vperm.xlu0 %1562, %v34
    %v1564 = vpop.permute.xlu0 %1563
    %1566 = vset.pattern.permute.xlu0 2
    %1567 = vperm.xlu0 %1566, %v35
    %v1568 = vpop.permute.xlu0 %1567
    %1570 = vset.pattern.permute.xlu0 2
    %1571 = vperm.xlu0 %1570, %v36
    %v1572 = vpop.permute.xlu0 %1571
    %1574 = vset.pattern.permute.xlu0 2
    %1575 = vperm.xlu0 %1574, %v37
    %v1576 = vpop.permute.xlu0 %1575
    %1578 = vset.pattern.permute.xlu0 2
    %1579 = vperm.xlu0 %1578, %v38
    %v1580 = vpop.permute.xlu0 %1579
    %1582 = vset.pattern.permute.xlu0 2
    %1583 = vperm.xlu0 %1582, %v39
    %v1584 = vpop.permute.xlu0 %1583
    %1586 = vset.pattern.permute.xlu0 2
    %1587 = vperm.xlu0 %1586, %v40
    %v1588 = vpop.permute.xlu0 %1587
    %1590 = vset.pattern.permute.xlu0 2
    %1591 = vperm.xlu0 %1590, %v41
    %v1592 = vpop.permute.xlu0 %1591
    %1594 = vset.pattern.permute.xlu0 2
    %1595 = vperm.xlu0 %1594, %v42
    %v1596 = vpop.permute.xlu0 %1595
    %1598 = vset.pattern.permute.xlu0 2
    %1599 = vperm.xlu0 %1598, %v43
    %v1600 = vpop.permute.xlu0 %1599
    %1602 = vset.pattern.permute.xlu0 2
    %1603 = vperm.xlu0 %1602, %v44
    %v1604 = vpop.permute.xlu0 %1603
    %1606 = vset.pattern.permute.xlu0 2
    %1607 = vperm.xlu0 %1606, %v45
    %v1608 = vpop.permute.xlu0 %1607
    %1610 = vset.pattern.permute.xlu0 2
    %1611 = vperm.xlu0 %1610, %v46
    %v1612 = vpop.permute.xlu0 %1611
    %v1614 = vmul.f32 %v1534, %v1552
    %v1615 = vmul.f32 %v1535, %v1556
    %v1616 = vmul.f32 %v1536, %v1560
    %v1617 = vmul.f32 %v1537, %v1564
    %v1618 = vmul.f32 %v1538, %v1568
    %v1619 = vmul.f32 %v1539, %v1572
    %v1620 = vmul.f32 %v1540, %v1576
    %v1621 = vmul.f32 %v1541, %v1580
    %v1622 = vmul.f32 %v1542, %v1584
    %v1623 = vmul.f32 %v1543, %v1588
    %v1624 = vmul.f32 %v1544, %v1592
    %v1625 = vmul.f32 %v1545, %v1596
    %v1626 = vmul.f32 %v1546, %v1600
    %v1627 = vmul.f32 %v1547, %v1604
    %v1628 = vmul.f32 %v1548, %v1608
    %v1629 = vmul.f32 %v1549, %v1612
    %v1630 = vadd.f32 %v1614, %v1615
    %v1631 = vadd.f32 %v1630, %v1616
    %v1632 = vadd.f32 %v1631, %v1617
    %v1633 = vadd.f32 %v1632, %v1618
    %v1634 = vadd.f32 %v1633, %v1619
    %v1635 = vadd.f32 %v1634, %v1620
    %v1636 = vadd.f32 %v1635, %v1621
    %v1637 = vadd.f32 %v1636, %v1622
    %v1638 = vadd.f32 %v1637, %v1623
    %v1639 = vadd.f32 %v1638, %v1624
    %v1640 = vadd.f32 %v1639, %v1625
    %v1641 = vadd.f32 %v1640, %v1626
    %v1642 = vadd.f32 %v1641, %v1627
    %v1643 = vadd.f32 %v1642, %v1628
    %v1644 = vadd.f32 %v1643, %v1629
    %v1645 = vrot.slane %v1644, 4
    %v1646 = vadd.f32 %v1644, %v1645
    %v1647 = vrot.slane %v1646, 2
    %v1648 = vadd.f32 %v1646, %v1647
    %v1649 = vrot.slane %v1648, 1
    %v1650 = vadd.f32 %v1648, %v1649
    %1651 = vset.pattern.permute.xlu0 3
    %1652 = vperm.xlu0 %1651, %v31
    %v1653 = vpop.permute.xlu0 %1652
    %v1655 = vadd.f32 %v1650, %v1653
    %1656 = vst [vmem:[#allocation2] sm:$0x1] %v1655
    // Predicated region
    $region22: #{tpu_custom_call.1} parent=1 // pred_check
      _
    $region23: #{tpu_custom_call.1} parent=1 // pred_check_branch
      %1658 = sbr.rel (0) target = $region25
    $region24: #{tpu_custom_call.1} parent=1 // pred_region
      %s1660 = ssub.s32 16, 16
      %1661 = vsyncadd [#allocation3], %s1660
      %s1663 = sshll.u32 [#allocation2], 4
      %s1664 = int_to_ptr.vmem [resolvable:$true] %s1663
      %1666 = dma.vmem_to_hbm [thread:$0]  %s1664, 16, %s5, [#allocation3]
    $region25: #{tpu_custom_call.1} parent=1 // pred_fallthru
      _
    // Predicated region
    $region26: #{tpu_custom_call.1} parent=1 // pred_check
      _
    $region27: #{tpu_custom_call.1} parent=1 // pred_check_branch
      %1668 = sbr.rel (0) target = $region29
    $region28: #{tpu_custom_call.1} parent=1 // pred_region
      %1669 = dma.done [#allocation3], 16
    $region29: #{tpu_custom_call.1} parent=1 // pred_fallthru
      _
    %1670 = vsyncpa [#allocation3], 1

</llo_original>
